<compile_context>
chip_gen: v7x
topology: tpu7x:2x2x1
jax: 0.10.0
libtpu: 0.0.40
codegen_flags: <defaults>
</compile_context>

<pallas_src>
import jax
import jax.numpy as jnp
import numpy as np
from jax.experimental import pallas as pl
from jax.experimental.pallas import tpu as pltpu

D_MODEL = 120
DFF = 512
NHEAD = 4
HEAD_DIM = D_MODEL // NHEAD   # 30
HP = 32                       # per-head padded width (30 real + 2 zero lanes)
QSEC = NHEAD * HP             # 128 lanes per Q / K / V section
LN_EPS = 1e-5
SCALE = HEAD_DIM ** -0.5


def _layer_norm(x, gamma, beta):
    mean = jnp.mean(x, axis=-1, keepdims=True)
    var = jnp.mean(jnp.square(x - mean), axis=-1, keepdims=True)
    return (x - mean) * jax.lax.rsqrt(var + LN_EPS) * gamma + beta


def encoder_layer_kernel(src_ref,
                         wqkv_ref, bqkv_ref, wo_ref, w1_ref, b1_ref, w2_ref, vec_ref,
                         out_ref, attn_ref):
    TB, S, _ = src_ref.shape
    M = TB * S
    # S is a multiple of 8 (f32 sublane count) in the supported configs, so these
    # (TB,S,D) <-> (M,D) reshapes are layout no-ops.
    x = src_ref[...].reshape(M, D_MODEL)                      # (M, D) f32

    # Packed small vectors: rows [bo, b2, g1, be1, g2, be2, pad, pad]
    bo = vec_ref[0:1, :]
    b2 = vec_ref[1:2, :]
    g1 = vec_ref[2:3, :]
    be1 = vec_ref[3:4, :]
    g2 = vec_ref[4:5, :]
    be2 = vec_ref[5:6, :]

    xb = x.astype(jnp.bfloat16)

    # Fused QKV projection (one lane-dense MXU matmul, bf16 in / f32 accumulate).
    # Column layout: [Q_h0..Q_h3 | K_h0..K_h3 | V_h0..V_h3], 32 lanes per head, zero-padded.
    # The attention scale is already folded into the Q weights/bias.
    qkv = jnp.dot(xb, wqkv_ref[...], preferred_element_type=jnp.float32) + bqkv_ref[...]
    qkv = qkv.reshape(TB, S, 3 * QSEC).astype(jnp.bfloat16)   # reshape in f32, cast once

    attn_out = jnp.zeros((M, D_MODEL), jnp.float32)           # accumulated output projection
    attn_row = jnp.zeros((TB, 1, S), jnp.float32)             # head-summed attention row 0

    for h in range(NHEAD):  # static 4-way unroll; everything inside is batched over TB
        q_h = qkv[:, :, h * HP:(h + 1) * HP]                               # (TB, S, HP)
        k_h = qkv[:, :, QSEC + h * HP:QSEC + (h + 1) * HP]                 # (TB, S, HP)
        v_h = qkv[:, :, 2 * QSEC + h * HP:2 * QSEC + (h + 1) * HP]         # (TB, S, HP)

        s_h = jnp.einsum('bqd,bkd->bqk', q_h, k_h,
                         preferred_element_type=jnp.float32)               # (TB, S, S)
        s_h = s_h - jnp.max(s_h, axis=-1, keepdims=True)
        p_h = jnp.exp(s_h)
        p_h = p_h * pl.reciprocal(jnp.sum(p_h, axis=-1, keepdims=True), approx=True)
        attn_row = attn_row + p_h[:, 0:1, :]

        ctx_h = jnp.einsum('bqk,bkd->bqd', p_h.astype(jnp.bfloat16), v_h,
                           preferred_element_type=jnp.float32)             # (TB, S, HP)
        # Per-head output projection accumulate (wo_ref is (NHEAD, HP, D), pad rows are zero).
        attn_out = attn_out + jnp.dot(ctx_h.reshape(M, HP).astype(jnp.bfloat16), wo_ref[h],
                                      preferred_element_type=jnp.float32)  # (M, D)

    attn_ref[...] = attn_row * (1.0 / NHEAD)

    # Residual + norm1 (dropout1 -> identity).
    x1 = _layer_norm(x + attn_out + bo, g1, be1)

    # FFN: linear1 -> relu -> (dropout=identity) -> linear2; residual + norm2.
    h1 = jnp.maximum(jnp.dot(x1.astype(jnp.bfloat16), w1_ref[...],
                             preferred_element_type=jnp.float32) + b1_ref[...], 0.0)
    h2 = jnp.dot(h1.astype(jnp.bfloat16), w2_ref[...],
                 preferred_element_type=jnp.float32) + b2
    x2 = _layer_norm(x1 + h2, g2, be2)

    out_ref[...] = x2.reshape(TB, S, D_MODEL)


def pack_params(params):
    """Fuse/pad/cast the per-head PyTorch-style params into kernel-friendly arrays."""
    (wq, wk, wv, bq, bk, bv, wo, bo, w1, b1, w2, b2, g1, be1, g2, be2) = params

    def head_block_w(w):  # (H, D, HD) -> (D, H*HP), head-major columns, zero pad lanes
        wp = jnp.pad(w, ((0, 0), (0, 0), (0, HP - HEAD_DIM)))
        return jnp.transpose(wp, (1, 0, 2)).reshape(D_MODEL, NHEAD * HP)

    def head_block_b(b):  # (H, 1, HD) -> (1, H*HP)
        bp = jnp.pad(b, ((0, 0), (0, 0), (0, HP - HEAD_DIM)))
        return bp.reshape(1, NHEAD * HP)

    # Attention scale folded into Q weights/bias.
    wqkv = jnp.concatenate([head_block_w(wq * SCALE),
                            head_block_w(wk),
                            head_block_w(wv)], axis=1).astype(jnp.bfloat16)   # (120, 384) bf16
    bqkv = jnp.concatenate([head_block_b(bq * SCALE),
                            head_block_b(bk),
                            head_block_b(bv)], axis=1)                        # (1, 384) f32

    # Output projection stays head-major: (H, HP, D) with zero pad rows.
    wo_p = jnp.pad(wo, ((0, 0), (0, HP - HEAD_DIM), (0, 0))).astype(jnp.bfloat16)  # (4, 32, 120)

    vecs = jnp.concatenate([bo, b2, g1, be1, g2, be2,
                            jnp.zeros((2, D_MODEL), jnp.float32)], axis=0)    # (8, 120)
    return (wqkv, bqkv, wo_p, w1.astype(jnp.bfloat16), b1,
            w2.astype(jnp.bfloat16), vecs)


def _pick_tb(B, S, target_rows=512):
    """Largest batch tile with TB*S <= target_rows that still leaves >= 2 grid steps."""
    best = 1
    for tb in range(1, B + 1):
        if B % tb:
            continue
        if tb * S > target_rows:
            continue
        if B // tb < min(2, B):
            continue
        best = tb
    return best


def transformer_encoder_layer(src, params, tb=None):
    B, S, D = src.shape
    assert D == D_MODEL
    if tb is None:
        tb = _pick_tb(B, S)
    assert B % tb == 0
    kparams = pack_params(params)

    def full_spec(arr):
        nd = arr.ndim
        return pl.BlockSpec(arr.shape, lambda b, _nd=nd: (0,) * _nd)

    in_specs = ([pl.BlockSpec((tb, S, D), lambda b: (b, 0, 0))]
                + [full_spec(p) for p in kparams])
    out_specs = [pl.BlockSpec((tb, S, D), lambda b: (b, 0, 0)),
                 pl.BlockSpec((tb, 1, S), lambda b: (b, 0, 0))]
    out_shape = [jax.ShapeDtypeStruct((B, S, D), jnp.float32),
                 jax.ShapeDtypeStruct((B, 1, S), jnp.float32)]

    out, attn_row = pl.pallas_call(
        encoder_layer_kernel,
        out_shape=out_shape,
        grid_spec=pltpu.PrefetchScalarGridSpec(
            num_scalar_prefetch=0,
            grid=(B // tb,),
            in_specs=in_specs,
            out_specs=out_specs),
        compiler_params=pltpu.CompilerParams(
            dimension_semantics=("parallel",),
            # Kernel needs only a few MiB even at TB*S=512; 32 MiB is safe on v5e/v6e
            # and is only half of v7x's 64 MiB per-core physical VMEM.
            vmem_limit_bytes=32 * 1024 * 1024),
    )(src, *kparams)

    # forward returns (src, attn[:, 0, :]) -- only query-row 0 of the head-averaged attention.
    return out, attn_row[:, 0, :]


def reference(src, params):
    (wq, wk, wv, bq, bk, bv, wo, bo, w1, b1, w2, b2, g1, be1, g2, be2) = params
    q = jnp.einsum('bsd,hdk->bhsk', src, wq) + bq[None]
    k = jnp.einsum('bsd,hdk->bhsk', src, wk) + bk[None]
    v = jnp.einsum('bsd,hdk->bhsk', src, wv) + bv[None]
    scores = jnp.einsum('bhsk,bhtk->bhst', q * SCALE, k)
    p = jax.nn.softmax(scores, axis=-1)
    ctx = jnp.einsum('bhst,bhtk->bhsk', p, v)
    attn_out = jnp.einsum('bhsk,hkd->bsd', ctx, wo) + bo
    x = _layer_norm(src + attn_out, g1, be1)
    h = jnp.maximum(jnp.einsum('bsd,df->bsf', x, w1) + b1, 0.0)
    x = _layer_norm(x + jnp.einsum('bsf,fd->bsd', h, w2) + b2, g2, be2)
    return x, jnp.mean(p, axis=1)[:, 0, :]


def make_params(key):
    ks = jax.random.split(key, 12)
    s = 0.05
    wq = jax.random.normal(ks[0], (NHEAD, D_MODEL, HEAD_DIM), jnp.float32) * s
    wk = jax.random.normal(ks[1], (NHEAD, D_MODEL, HEAD_DIM), jnp.float32) * s
    wv = jax.random.normal(ks[2], (NHEAD, D_MODEL, HEAD_DIM), jnp.float32) * s
    bq = jax.random.normal(ks[3], (NHEAD, 1, HEAD_DIM), jnp.float32) * s
    bk = jax.random.normal(ks[4], (NHEAD, 1, HEAD_DIM), jnp.float32) * s
    bv = jax.random.normal(ks[5], (NHEAD, 1, HEAD_DIM), jnp.float32) * s
    wo = jax.random.normal(ks[6], (NHEAD, HEAD_DIM, D_MODEL), jnp.float32) * s
    bo = jax.random.normal(ks[7], (1, D_MODEL), jnp.float32) * s
    w1 = jax.random.normal(ks[8], (D_MODEL, DFF), jnp.float32) * s
    b1 = jax.random.normal(ks[9], (1, DFF), jnp.float32) * s
    w2 = jax.random.normal(ks[10], (DFF, D_MODEL), jnp.float32) * s
    b2 = jax.random.normal(ks[11], (1, D_MODEL), jnp.float32) * s
    g1 = jnp.ones((1, D_MODEL), jnp.float32)
    be1 = jnp.zeros((1, D_MODEL), jnp.float32)
    g2 = jnp.ones((1, D_MODEL), jnp.float32)
    be2 = jnp.zeros((1, D_MODEL), jnp.float32)
    return (wq, wk, wv, bq, bk, bv, wo, bo, w1, b1, w2, b2, g1, be1, g2, be2)


if __name__ == "__main__":
    key = jax.random.PRNGKey(0)
    k_src, k_par = jax.random.split(key)
    B, S = 2, 8
    src = jax.random.normal(k_src, (B, S, D_MODEL), jnp.float32)
    params = make_params(k_par)

    out, attn_row = transformer_encoder_layer(src, params)
    out = jax.block_until_ready(out)
    attn_row = jax.block_until_ready(attn_row)

    ref_out, ref_attn = reference(src, params)
    np.testing.assert_allclose(np.asarray(out), np.asarray(ref_out), rtol=2e-2, atol=2e-2)
    np.testing.assert_allclose(np.asarray(attn_row), np.asarray(ref_attn), rtol=2e-2, atol=2e-2)

    assert out.shape == (B, S, D_MODEL) and attn_row.shape == (B, S)
    print("KERNEL_OK")
</pallas_src>

<mosaic_0001>
module attributes {stable_mosaic.version = 11 : i64} {
  func.func @encoder_layer_kernel(%arg0: i32, %arg1: memref<1x8x120xf32, #tpu.memory_space<vmem>>, %arg2: memref<120x384xbf16, #tpu.memory_space<vmem>>, %arg3: memref<1x384xf32, #tpu.memory_space<vmem>>, %arg4: memref<4x32x120xbf16, #tpu.memory_space<vmem>>, %arg5: memref<120x512xbf16, #tpu.memory_space<vmem>>, %arg6: memref<1x512xf32, #tpu.memory_space<vmem>>, %arg7: memref<512x120xbf16, #tpu.memory_space<vmem>>, %arg8: memref<8x120xf32, #tpu.memory_space<vmem>>, %arg9: memref<1x8x120xf32, #tpu.memory_space<vmem>>, %arg10: memref<1x1x8xf32, #tpu.memory_space<vmem>>) attributes {dimension_semantics = [#tpu.dimension_semantics<parallel>], iteration_bounds = array<i64: 2>, scalar_prefetch = 0 : i64, scratch_operands = 0 : i64, tpu.core_type = #tpu.core_type<tc>, window_params = [{transform_indices = @transform_0, window_bounds = array<i64: 1, 8, 120>}, {pipeline_mode = #tpu.pipeline_mode<synchronous>, transform_indices = @transform_1, window_bounds = array<i64: 120, 384>}, {pipeline_mode = #tpu.pipeline_mode<synchronous>, transform_indices = @transform_2, window_bounds = array<i64: 1, 384>}, {pipeline_mode = #tpu.pipeline_mode<synchronous>, transform_indices = @transform_3, window_bounds = array<i64: 4, 32, 120>}, {pipeline_mode = #tpu.pipeline_mode<synchronous>, transform_indices = @transform_4, window_bounds = array<i64: 120, 512>}, {pipeline_mode = #tpu.pipeline_mode<synchronous>, transform_indices = @transform_5, window_bounds = array<i64: 1, 512>}, {pipeline_mode = #tpu.pipeline_mode<synchronous>, transform_indices = @transform_6, window_bounds = array<i64: 512, 120>}, {pipeline_mode = #tpu.pipeline_mode<synchronous>, transform_indices = @transform_7, window_bounds = array<i64: 8, 120>}, {transform_indices = @transform_8, window_bounds = array<i64: 1, 8, 120>}, {transform_indices = @transform_9, window_bounds = array<i64: 1, 1, 8>}]} {
    %c0 = arith.constant 0 : index
    %c0_0 = arith.constant 0 : index
    %c0_1 = arith.constant 0 : index
    %0 = vector.load %arg1[%c0, %c0_0, %c0_1] : memref<1x8x120xf32, #tpu.memory_space<vmem>>, vector<1x8x120xf32>
    %1 = vector.shape_cast %0 : vector<1x8x120xf32> to vector<8x120xf32>
    %c0_2 = arith.constant 0 : index
    %c0_3 = arith.constant 0 : index
    %2 = vector.load %arg8[%c0_2, %c0_3] : memref<8x120xf32, #tpu.memory_space<vmem>>, vector<1x120xf32>
    %c1 = arith.constant 1 : index
    %c0_4 = arith.constant 0 : index
    %3 = vector.load %arg8[%c1, %c0_4] : memref<8x120xf32, #tpu.memory_space<vmem>>, vector<1x120xf32>
    %c2 = arith.constant 2 : index
    %c0_5 = arith.constant 0 : index
    %4 = vector.load %arg8[%c2, %c0_5] : memref<8x120xf32, #tpu.memory_space<vmem>>, vector<1x120xf32>
    %c3 = arith.constant 3 : index
    %c0_6 = arith.constant 0 : index
    %5 = vector.load %arg8[%c3, %c0_6] : memref<8x120xf32, #tpu.memory_space<vmem>>, vector<1x120xf32>
    %c4 = arith.constant 4 : index
    %c0_7 = arith.constant 0 : index
    %6 = vector.load %arg8[%c4, %c0_7] : memref<8x120xf32, #tpu.memory_space<vmem>>, vector<1x120xf32>
    %c5 = arith.constant 5 : index
    %c0_8 = arith.constant 0 : index
    %7 = vector.load %arg8[%c5, %c0_8] : memref<8x120xf32, #tpu.memory_space<vmem>>, vector<1x120xf32>
    %8 = arith.truncf %1 : vector<8x120xf32> to vector<8x120xbf16>
    %c0_9 = arith.constant 0 : index
    %c0_10 = arith.constant 0 : index
    %9 = vector.load %arg2[%c0_9, %c0_10] : memref<120x384xbf16, #tpu.memory_space<vmem>>, vector<120x384xbf16>
    %cst = arith.constant dense<0.000000e+00> : vector<8x384xf32>
    %10 = tpu.matmul %8, %9, %cst {dimension_numbers = #tpu.dot_dimension_numbers<[1], [0], [0], [1], [0, 0, 1, 1], [], []>} : vector<8x120xbf16>, vector<120x384xbf16>, vector<8x384xf32> -> vector<8x384xf32>
    %c0_11 = arith.constant 0 : index
    %c0_12 = arith.constant 0 : index
    %11 = vector.load %arg3[%c0_11, %c0_12] : memref<1x384xf32, #tpu.memory_space<vmem>>, vector<1x384xf32>
    %12 = vector.broadcast %11 : vector<1x384xf32> to vector<8x384xf32>
    %13 = arith.addf %10, %12 : vector<8x384xf32>
    %14 = vector.shape_cast %13 : vector<8x384xf32> to vector<1x8x384xf32>
    %15 = arith.truncf %14 : vector<1x8x384xf32> to vector<1x8x384xbf16>
    %cst_13 = arith.constant 0.000000e+00 : f32
    %16 = vector.broadcast %cst_13 : f32 to vector<8x120xf32>
    %cst_14 = arith.constant 0.000000e+00 : f32
    %17 = vector.broadcast %cst_14 : f32 to vector<1x1x8xf32>
    %18 = vector.extract_strided_slice %15 {offsets = [0, 0, 0], sizes = [1, 8, 32], strides = [1, 1, 1]} : vector<1x8x384xbf16> to vector<1x8x32xbf16>
    %19 = vector.extract_strided_slice %15 {offsets = [0, 0, 128], sizes = [1, 8, 32], strides = [1, 1, 1]} : vector<1x8x384xbf16> to vector<1x8x32xbf16>
    %20 = vector.extract_strided_slice %15 {offsets = [0, 0, 256], sizes = [1, 8, 32], strides = [1, 1, 1]} : vector<1x8x384xbf16> to vector<1x8x32xbf16>
    "tpu.trace_start"() <{level = 10 : i32, message = "bqd,bkd->bqk"}> : () -> ()
    %cst_15 = arith.constant dense<0.000000e+00> : vector<1x8x8xf32>
    %21 = tpu.matmul %18, %19, %cst_15 {dimension_numbers = #tpu.dot_dimension_numbers<[2], [2], [1], [1], [0, 0, 0, 1, 1, 1], [0], [0]>} : vector<1x8x32xbf16>, vector<1x8x32xbf16>, vector<1x8x8xf32> -> vector<1x8x8xf32>
    "tpu.trace_stop"() : () -> ()
    %cst_16 = arith.constant dense<0xFF800000> : vector<1x8xf32>
    %22 = vector.multi_reduction <maximumf>, %21, %cst_16 [2] : vector<1x8x8xf32> to vector<1x8xf32>
    %23 = vector.shape_cast %22 : vector<1x8xf32> to vector<1x8x1xf32>
    %24 = vector.broadcast %23 : vector<1x8x1xf32> to vector<1x8x8xf32>
    %25 = arith.subf %21, %24 : vector<1x8x8xf32>
    %26 = math.exp %25 : vector<1x8x8xf32>
    %cst_17 = arith.constant dense<0.000000e+00> : vector<1x8xf32>
    %27 = vector.multi_reduction <add>, %26, %cst_17 [2] : vector<1x8x8xf32> to vector<1x8xf32>
    %28 = vector.shape_cast %27 : vector<1x8xf32> to vector<1x8x1xf32>
    %29 = tpu.reciprocal %28 {approx = true} : vector<1x8x1xf32> -> vector<1x8x1xf32>
    %30 = vector.broadcast %29 : vector<1x8x1xf32> to vector<1x8x8xf32>
    %31 = arith.mulf %26, %30 : vector<1x8x8xf32>
    %32 = vector.extract_strided_slice %31 {offsets = [0, 0, 0], sizes = [1, 1, 8], strides = [1, 1, 1]} : vector<1x8x8xf32> to vector<1x1x8xf32>
    %33 = arith.addf %17, %32 : vector<1x1x8xf32>
    %34 = arith.truncf %31 : vector<1x8x8xf32> to vector<1x8x8xbf16>
    "tpu.trace_start"() <{level = 10 : i32, message = "bqk,bkd->bqd"}> : () -> ()
    %cst_18 = arith.constant dense<0.000000e+00> : vector<1x8x32xf32>
    %35 = tpu.matmul %34, %20, %cst_18 {dimension_numbers = #tpu.dot_dimension_numbers<[2], [1], [1], [2], [0, 0, 0, 1, 1, 2], [0], [0]>} : vector<1x8x8xbf16>, vector<1x8x32xbf16>, vector<1x8x32xf32> -> vector<1x8x32xf32>
    "tpu.trace_stop"() : () -> ()
    %36 = vector.shape_cast %35 : vector<1x8x32xf32> to vector<8x32xf32>
    %37 = arith.truncf %36 : vector<8x32xf32> to vector<8x32xbf16>
    %c0_19 = arith.constant 0 : index
    %c0_20 = arith.constant 0 : index
    %c0_21 = arith.constant 0 : index
    %38 = vector.load %arg4[%c0_19, %c0_20, %c0_21] : memref<4x32x120xbf16, #tpu.memory_space<vmem>>, vector<1x32x120xbf16>
    %39 = vector.shape_cast %38 : vector<1x32x120xbf16> to vector<32x120xbf16>
    %cst_22 = arith.constant dense<0.000000e+00> : vector<8x120xf32>
    %40 = tpu.matmul %37, %39, %cst_22 {dimension_numbers = #tpu.dot_dimension_numbers<[1], [0], [0], [1], [0, 0, 1, 1], [], []>} : vector<8x32xbf16>, vector<32x120xbf16>, vector<8x120xf32> -> vector<8x120xf32>
    %41 = arith.addf %16, %40 : vector<8x120xf32>
    %42 = vector.extract_strided_slice %15 {offsets = [0, 0, 32], sizes = [1, 8, 32], strides = [1, 1, 1]} : vector<1x8x384xbf16> to vector<1x8x32xbf16>
    %43 = vector.extract_strided_slice %15 {offsets = [0, 0, 160], sizes = [1, 8, 32], strides = [1, 1, 1]} : vector<1x8x384xbf16> to vector<1x8x32xbf16>
    %44 = vector.extract_strided_slice %15 {offsets = [0, 0, 288], sizes = [1, 8, 32], strides = [1, 1, 1]} : vector<1x8x384xbf16> to vector<1x8x32xbf16>
    "tpu.trace_start"() <{level = 10 : i32, message = "bqd,bkd->bqk"}> : () -> ()
    %cst_23 = arith.constant dense<0.000000e+00> : vector<1x8x8xf32>
    %45 = tpu.matmul %42, %43, %cst_23 {dimension_numbers = #tpu.dot_dimension_numbers<[2], [2], [1], [1], [0, 0, 0, 1, 1, 1], [0], [0]>} : vector<1x8x32xbf16>, vector<1x8x32xbf16>, vector<1x8x8xf32> -> vector<1x8x8xf32>
    "tpu.trace_stop"() : () -> ()
    %cst_24 = arith.constant dense<0xFF800000> : vector<1x8xf32>
    %46 = vector.multi_reduction <maximumf>, %45, %cst_24 [2] : vector<1x8x8xf32> to vector<1x8xf32>
    %47 = vector.shape_cast %46 : vector<1x8xf32> to vector<1x8x1xf32>
    %48 = vector.broadcast %47 : vector<1x8x1xf32> to vector<1x8x8xf32>
    %49 = arith.subf %45, %48 : vector<1x8x8xf32>
    %50 = math.exp %49 : vector<1x8x8xf32>
    %cst_25 = arith.constant dense<0.000000e+00> : vector<1x8xf32>
    %51 = vector.multi_reduction <add>, %50, %cst_25 [2] : vector<1x8x8xf32> to vector<1x8xf32>
    %52 = vector.shape_cast %51 : vector<1x8xf32> to vector<1x8x1xf32>
    %53 = tpu.reciprocal %52 {approx = true} : vector<1x8x1xf32> -> vector<1x8x1xf32>
    %54 = vector.broadcast %53 : vector<1x8x1xf32> to vector<1x8x8xf32>
    %55 = arith.mulf %50, %54 : vector<1x8x8xf32>
    %56 = vector.extract_strided_slice %55 {offsets = [0, 0, 0], sizes = [1, 1, 8], strides = [1, 1, 1]} : vector<1x8x8xf32> to vector<1x1x8xf32>
    %57 = arith.addf %33, %56 : vector<1x1x8xf32>
    %58 = arith.truncf %55 : vector<1x8x8xf32> to vector<1x8x8xbf16>
    "tpu.trace_start"() <{level = 10 : i32, message = "bqk,bkd->bqd"}> : () -> ()
    %cst_26 = arith.constant dense<0.000000e+00> : vector<1x8x32xf32>
    %59 = tpu.matmul %58, %44, %cst_26 {dimension_numbers = #tpu.dot_dimension_numbers<[2], [1], [1], [2], [0, 0, 0, 1, 1, 2], [0], [0]>} : vector<1x8x8xbf16>, vector<1x8x32xbf16>, vector<1x8x32xf32> -> vector<1x8x32xf32>
    "tpu.trace_stop"() : () -> ()
    %60 = vector.shape_cast %59 : vector<1x8x32xf32> to vector<8x32xf32>
    %61 = arith.truncf %60 : vector<8x32xf32> to vector<8x32xbf16>
    %c1_27 = arith.constant 1 : index
    %c0_28 = arith.constant 0 : index
    %c0_29 = arith.constant 0 : index
    %62 = vector.load %arg4[%c1_27, %c0_28, %c0_29] : memref<4x32x120xbf16, #tpu.memory_space<vmem>>, vector<1x32x120xbf16>
    %63 = vector.shape_cast %62 : vector<1x32x120xbf16> to vector<32x120xbf16>
    %cst_30 = arith.constant dense<0.000000e+00> : vector<8x120xf32>
    %64 = tpu.matmul %61, %63, %cst_30 {dimension_numbers = #tpu.dot_dimension_numbers<[1], [0], [0], [1], [0, 0, 1, 1], [], []>} : vector<8x32xbf16>, vector<32x120xbf16>, vector<8x120xf32> -> vector<8x120xf32>
    %65 = arith.addf %41, %64 : vector<8x120xf32>
    %66 = vector.extract_strided_slice %15 {offsets = [0, 0, 64], sizes = [1, 8, 32], strides = [1, 1, 1]} : vector<1x8x384xbf16> to vector<1x8x32xbf16>
    %67 = vector.extract_strided_slice %15 {offsets = [0, 0, 192], sizes = [1, 8, 32], strides = [1, 1, 1]} : vector<1x8x384xbf16> to vector<1x8x32xbf16>
    %68 = vector.extract_strided_slice %15 {offsets = [0, 0, 320], sizes = [1, 8, 32], strides = [1, 1, 1]} : vector<1x8x384xbf16> to vector<1x8x32xbf16>
    "tpu.trace_start"() <{level = 10 : i32, message = "bqd,bkd->bqk"}> : () -> ()
    %cst_31 = arith.constant dense<0.000000e+00> : vector<1x8x8xf32>
    %69 = tpu.matmul %66, %67, %cst_31 {dimension_numbers = #tpu.dot_dimension_numbers<[2], [2], [1], [1], [0, 0, 0, 1, 1, 1], [0], [0]>} : vector<1x8x32xbf16>, vector<1x8x32xbf16>, vector<1x8x8xf32> -> vector<1x8x8xf32>
    "tpu.trace_stop"() : () -> ()
    %cst_32 = arith.constant dense<0xFF800000> : vector<1x8xf32>
    %70 = vector.multi_reduction <maximumf>, %69, %cst_32 [2] : vector<1x8x8xf32> to vector<1x8xf32>
    %71 = vector.shape_cast %70 : vector<1x8xf32> to vector<1x8x1xf32>
    %72 = vector.broadcast %71 : vector<1x8x1xf32> to vector<1x8x8xf32>
    %73 = arith.subf %69, %72 : vector<1x8x8xf32>
    %74 = math.exp %73 : vector<1x8x8xf32>
    %cst_33 = arith.constant dense<0.000000e+00> : vector<1x8xf32>
    %75 = vector.multi_reduction <add>, %74, %cst_33 [2] : vector<1x8x8xf32> to vector<1x8xf32>
    %76 = vector.shape_cast %75 : vector<1x8xf32> to vector<1x8x1xf32>
    %77 = tpu.reciprocal %76 {approx = true} : vector<1x8x1xf32> -> vector<1x8x1xf32>
    %78 = vector.broadcast %77 : vector<1x8x1xf32> to vector<1x8x8xf32>
    %79 = arith.mulf %74, %78 : vector<1x8x8xf32>
    %80 = vector.extract_strided_slice %79 {offsets = [0, 0, 0], sizes = [1, 1, 8], strides = [1, 1, 1]} : vector<1x8x8xf32> to vector<1x1x8xf32>
    %81 = arith.addf %57, %80 : vector<1x1x8xf32>
    %82 = arith.truncf %79 : vector<1x8x8xf32> to vector<1x8x8xbf16>
    "tpu.trace_start"() <{level = 10 : i32, message = "bqk,bkd->bqd"}> : () -> ()
    %cst_34 = arith.constant dense<0.000000e+00> : vector<1x8x32xf32>
    %83 = tpu.matmul %82, %68, %cst_34 {dimension_numbers = #tpu.dot_dimension_numbers<[2], [1], [1], [2], [0, 0, 0, 1, 1, 2], [0], [0]>} : vector<1x8x8xbf16>, vector<1x8x32xbf16>, vector<1x8x32xf32> -> vector<1x8x32xf32>
    "tpu.trace_stop"() : () -> ()
    %84 = vector.shape_cast %83 : vector<1x8x32xf32> to vector<8x32xf32>
    %85 = arith.truncf %84 : vector<8x32xf32> to vector<8x32xbf16>
    %c2_35 = arith.constant 2 : index
    %c0_36 = arith.constant 0 : index
    %c0_37 = arith.constant 0 : index
    %86 = vector.load %arg4[%c2_35, %c0_36, %c0_37] : memref<4x32x120xbf16, #tpu.memory_space<vmem>>, vector<1x32x120xbf16>
    %87 = vector.shape_cast %86 : vector<1x32x120xbf16> to vector<32x120xbf16>
    %cst_38 = arith.constant dense<0.000000e+00> : vector<8x120xf32>
    %88 = tpu.matmul %85, %87, %cst_38 {dimension_numbers = #tpu.dot_dimension_numbers<[1], [0], [0], [1], [0, 0, 1, 1], [], []>} : vector<8x32xbf16>, vector<32x120xbf16>, vector<8x120xf32> -> vector<8x120xf32>
    %89 = arith.addf %65, %88 : vector<8x120xf32>
    %90 = vector.extract_strided_slice %15 {offsets = [0, 0, 96], sizes = [1, 8, 32], strides = [1, 1, 1]} : vector<1x8x384xbf16> to vector<1x8x32xbf16>
    %91 = vector.extract_strided_slice %15 {offsets = [0, 0, 224], sizes = [1, 8, 32], strides = [1, 1, 1]} : vector<1x8x384xbf16> to vector<1x8x32xbf16>
    %92 = vector.extract_strided_slice %15 {offsets = [0, 0, 352], sizes = [1, 8, 32], strides = [1, 1, 1]} : vector<1x8x384xbf16> to vector<1x8x32xbf16>
    "tpu.trace_start"() <{level = 10 : i32, message = "bqd,bkd->bqk"}> : () -> ()
    %cst_39 = arith.constant dense<0.000000e+00> : vector<1x8x8xf32>
    %93 = tpu.matmul %90, %91, %cst_39 {dimension_numbers = #tpu.dot_dimension_numbers<[2], [2], [1], [1], [0, 0, 0, 1, 1, 1], [0], [0]>} : vector<1x8x32xbf16>, vector<1x8x32xbf16>, vector<1x8x8xf32> -> vector<1x8x8xf32>
    "tpu.trace_stop"() : () -> ()
    %cst_40 = arith.constant dense<0xFF800000> : vector<1x8xf32>
    %94 = vector.multi_reduction <maximumf>, %93, %cst_40 [2] : vector<1x8x8xf32> to vector<1x8xf32>
    %95 = vector.shape_cast %94 : vector<1x8xf32> to vector<1x8x1xf32>
    %96 = vector.broadcast %95 : vector<1x8x1xf32> to vector<1x8x8xf32>
    %97 = arith.subf %93, %96 : vector<1x8x8xf32>
    %98 = math.exp %97 : vector<1x8x8xf32>
    %cst_41 = arith.constant dense<0.000000e+00> : vector<1x8xf32>
    %99 = vector.multi_reduction <add>, %98, %cst_41 [2] : vector<1x8x8xf32> to vector<1x8xf32>
    %100 = vector.shape_cast %99 : vector<1x8xf32> to vector<1x8x1xf32>
    %101 = tpu.reciprocal %100 {approx = true} : vector<1x8x1xf32> -> vector<1x8x1xf32>
    %102 = vector.broadcast %101 : vector<1x8x1xf32> to vector<1x8x8xf32>
    %103 = arith.mulf %98, %102 : vector<1x8x8xf32>
    %104 = vector.extract_strided_slice %103 {offsets = [0, 0, 0], sizes = [1, 1, 8], strides = [1, 1, 1]} : vector<1x8x8xf32> to vector<1x1x8xf32>
    %105 = arith.addf %81, %104 : vector<1x1x8xf32>
    %106 = arith.truncf %103 : vector<1x8x8xf32> to vector<1x8x8xbf16>
    "tpu.trace_start"() <{level = 10 : i32, message = "bqk,bkd->bqd"}> : () -> ()
    %cst_42 = arith.constant dense<0.000000e+00> : vector<1x8x32xf32>
    %107 = tpu.matmul %106, %92, %cst_42 {dimension_numbers = #tpu.dot_dimension_numbers<[2], [1], [1], [2], [0, 0, 0, 1, 1, 2], [0], [0]>} : vector<1x8x8xbf16>, vector<1x8x32xbf16>, vector<1x8x32xf32> -> vector<1x8x32xf32>
    "tpu.trace_stop"() : () -> ()
    %108 = vector.shape_cast %107 : vector<1x8x32xf32> to vector<8x32xf32>
    %109 = arith.truncf %108 : vector<8x32xf32> to vector<8x32xbf16>
    %c3_43 = arith.constant 3 : index
    %c0_44 = arith.constant 0 : index
    %c0_45 = arith.constant 0 : index
    %110 = vector.load %arg4[%c3_43, %c0_44, %c0_45] : memref<4x32x120xbf16, #tpu.memory_space<vmem>>, vector<1x32x120xbf16>
    %111 = vector.shape_cast %110 : vector<1x32x120xbf16> to vector<32x120xbf16>
    %cst_46 = arith.constant dense<0.000000e+00> : vector<8x120xf32>
    %112 = tpu.matmul %109, %111, %cst_46 {dimension_numbers = #tpu.dot_dimension_numbers<[1], [0], [0], [1], [0, 0, 1, 1], [], []>} : vector<8x32xbf16>, vector<32x120xbf16>, vector<8x120xf32> -> vector<8x120xf32>
    %113 = arith.addf %89, %112 : vector<8x120xf32>
    %cst_47 = arith.constant 2.500000e-01 : f32
    %114 = vector.broadcast %cst_47 : f32 to vector<1x1x8xf32>
    %115 = arith.mulf %105, %114 : vector<1x1x8xf32>
    %c0_48 = arith.constant 0 : index
    %c0_49 = arith.constant 0 : index
    %c0_50 = arith.constant 0 : index
    %116 = vector.load %arg10[%c0_48, %c0_49, %c0_50] : memref<1x1x8xf32, #tpu.memory_space<vmem>>, vector<1x1x8xf32>
    tpu.vector_store %arg10[%c0_48, %c0_49, %c0_50], %115 {strides = array<i32>} : memref<1x1x8xf32, #tpu.memory_space<vmem>>, vector<1x1x8xf32>,
    %117 = arith.addf %1, %113 : vector<8x120xf32>
    %118 = vector.broadcast %2 : vector<1x120xf32> to vector<8x120xf32>
    %119 = arith.addf %117, %118 : vector<8x120xf32>
    %cst_51 = arith.constant dense<0.000000e+00> : vector<8xf32>
    %120 = vector.multi_reduction <add>, %119, %cst_51 [1] : vector<8x120xf32> to vector<8xf32>
    %121 = vector.shape_cast %120 : vector<8xf32> to vector<8x1xf32>
    %cst_52 = arith.constant 1.200000e+02 : f32
    %122 = vector.broadcast %cst_52 : f32 to vector<8x1xf32>
    %123 = arith.divf %121, %122 : vector<8x1xf32>
    %124 = vector.broadcast %123 : vector<8x1xf32> to vector<8x120xf32>
    %125 = arith.subf %119, %124 : vector<8x120xf32>
    %126 = arith.mulf %125, %125 : vector<8x120xf32>
    %cst_53 = arith.constant dense<0.000000e+00> : vector<8xf32>
    %127 = vector.multi_reduction <add>, %126, %cst_53 [1] : vector<8x120xf32> to vector<8xf32>
    %128 = vector.shape_cast %127 : vector<8xf32> to vector<8x1xf32>
    %cst_54 = arith.constant 1.200000e+02 : f32
    %129 = vector.broadcast %cst_54 : f32 to vector<8x1xf32>
    %130 = arith.divf %128, %129 : vector<8x1xf32>
    %131 = vector.broadcast %123 : vector<8x1xf32> to vector<8x120xf32>
    %132 = arith.subf %119, %131 : vector<8x120xf32>
    %cst_55 = arith.constant 9.99999974E-6 : f32
    %133 = vector.broadcast %cst_55 : f32 to vector<8x1xf32>
    %134 = arith.addf %130, %133 : vector<8x1xf32>
    %135 = math.rsqrt %134 : vector<8x1xf32>
    %136 = vector.broadcast %135 : vector<8x1xf32> to vector<8x120xf32>
    %137 = arith.mulf %132, %136 : vector<8x120xf32>
    %138 = vector.broadcast %4 : vector<1x120xf32> to vector<8x120xf32>
    %139 = arith.mulf %137, %138 : vector<8x120xf32>
    %140 = vector.broadcast %5 : vector<1x120xf32> to vector<8x120xf32>
    %141 = arith.addf %139, %140 : vector<8x120xf32>
    %142 = arith.truncf %141 : vector<8x120xf32> to vector<8x120xbf16>
    %c0_56 = arith.constant 0 : index
    %c0_57 = arith.constant 0 : index
    %143 = vector.load %arg5[%c0_56, %c0_57] : memref<120x512xbf16, #tpu.memory_space<vmem>>, vector<120x512xbf16>
    %cst_58 = arith.constant dense<0.000000e+00> : vector<8x512xf32>
    %144 = tpu.matmul %142, %143, %cst_58 {dimension_numbers = #tpu.dot_dimension_numbers<[1], [0], [0], [1], [0, 0, 1, 1], [], []>} : vector<8x120xbf16>, vector<120x512xbf16>, vector<8x512xf32> -> vector<8x512xf32>
    %c0_59 = arith.constant 0 : index
    %c0_60 = arith.constant 0 : index
    %145 = vector.load %arg6[%c0_59, %c0_60] : memref<1x512xf32, #tpu.memory_space<vmem>>, vector<1x512xf32>
    %146 = vector.broadcast %145 : vector<1x512xf32> to vector<8x512xf32>
    %147 = arith.addf %144, %146 : vector<8x512xf32>
    %cst_61 = arith.constant 0.000000e+00 : f32
    %148 = vector.broadcast %cst_61 : f32 to vector<8x512xf32>
    %149 = arith.maximumf %147, %148 : vector<8x512xf32>
    %150 = arith.truncf %149 : vector<8x512xf32> to vector<8x512xbf16>
    %c0_62 = arith.constant 0 : index
    %c0_63 = arith.constant 0 : index
    %151 = vector.load %arg7[%c0_62, %c0_63] : memref<512x120xbf16, #tpu.memory_space<vmem>>, vector<512x120xbf16>
    %cst_64 = arith.constant dense<0.000000e+00> : vector<8x120xf32>
    %152 = tpu.matmul %150, %151, %cst_64 {dimension_numbers = #tpu.dot_dimension_numbers<[1], [0], [0], [1], [0, 0, 1, 1], [], []>} : vector<8x512xbf16>, vector<512x120xbf16>, vector<8x120xf32> -> vector<8x120xf32>
    %153 = vector.broadcast %3 : vector<1x120xf32> to vector<8x120xf32>
    %154 = arith.addf %152, %153 : vector<8x120xf32>
    %155 = arith.addf %141, %154 : vector<8x120xf32>
    %cst_65 = arith.constant dense<0.000000e+00> : vector<8xf32>
    %156 = vector.multi_reduction <add>, %155, %cst_65 [1] : vector<8x120xf32> to vector<8xf32>
    %157 = vector.shape_cast %156 : vector<8xf32> to vector<8x1xf32>
    %cst_66 = arith.constant 1.200000e+02 : f32
    %158 = vector.broadcast %cst_66 : f32 to vector<8x1xf32>
    %159 = arith.divf %157, %158 : vector<8x1xf32>
    %160 = vector.broadcast %159 : vector<8x1xf32> to vector<8x120xf32>
    %161 = arith.subf %155, %160 : vector<8x120xf32>
    %162 = arith.mulf %161, %161 : vector<8x120xf32>
    %cst_67 = arith.constant dense<0.000000e+00> : vector<8xf32>
    %163 = vector.multi_reduction <add>, %162, %cst_67 [1] : vector<8x120xf32> to vector<8xf32>
    %164 = vector.shape_cast %163 : vector<8xf32> to vector<8x1xf32>
    %cst_68 = arith.constant 1.200000e+02 : f32
    %165 = vector.broadcast %cst_68 : f32 to vector<8x1xf32>
    %166 = arith.divf %164, %165 : vector<8x1xf32>
    %167 = vector.broadcast %159 : vector<8x1xf32> to vector<8x120xf32>
    %168 = arith.subf %155, %167 : vector<8x120xf32>
    %cst_69 = arith.constant 9.99999974E-6 : f32
    %169 = vector.broadcast %cst_69 : f32 to vector<8x1xf32>
    %170 = arith.addf %166, %169 : vector<8x1xf32>
    %171 = math.rsqrt %170 : vector<8x1xf32>
    %172 = vector.broadcast %171 : vector<8x1xf32> to vector<8x120xf32>
    %173 = arith.mulf %168, %172 : vector<8x120xf32>
    %174 = vector.broadcast %6 : vector<1x120xf32> to vector<8x120xf32>
    %175 = arith.mulf %173, %174 : vector<8x120xf32>
    %176 = vector.broadcast %7 : vector<1x120xf32> to vector<8x120xf32>
    %177 = arith.addf %175, %176 : vector<8x120xf32>
    %178 = vector.shape_cast %177 : vector<8x120xf32> to vector<1x8x120xf32>
    %c0_70 = arith.constant 0 : index
    %c0_71 = arith.constant 0 : index
    %c0_72 = arith.constant 0 : index
    %179 = vector.load %arg9[%c0_70, %c0_71, %c0_72] : memref<1x8x120xf32, #tpu.memory_space<vmem>>, vector<1x8x120xf32>
    tpu.vector_store %arg9[%c0_70, %c0_71, %c0_72], %178 {strides = array<i32>} : memref<1x8x120xf32, #tpu.memory_space<vmem>>, vector<1x8x120xf32>,
    return
  }
  func.func @transform_0(%arg0: i32) -> (i32, i32, i32) {
    %c0_i32 = arith.constant 0 : i32
    %c0_i32_0 = arith.constant 0 : i32
    %c0_i32_1 = arith.constant 0 : i32
    return %arg0, %c0_i32, %c0_i32_0 : i32, i32, i32
  }
  func.func @transform_1(%arg0: i32) -> (i32, i32) {
    %c0_i32 = arith.constant 0 : i32
    %c0_i32_0 = arith.constant 0 : i32
    %c0_i32_1 = arith.constant 0 : i32
    return %c0_i32, %c0_i32_0 : i32, i32
  }
  func.func @transform_2(%arg0: i32) -> (i32, i32) {
    %c0_i32 = arith.constant 0 : i32
    %c0_i32_0 = arith.constant 0 : i32
    %c0_i32_1 = arith.constant 0 : i32
    return %c0_i32, %c0_i32_0 : i32, i32
  }
  func.func @transform_3(%arg0: i32) -> (i32, i32, i32) {
    %c0_i32 = arith.constant 0 : i32
    %c0_i32_0 = arith.constant 0 : i32
    %c0_i32_1 = arith.constant 0 : i32
    %c0_i32_2 = arith.constant 0 : i32
    return %c0_i32, %c0_i32_0, %c0_i32_1 : i32, i32, i32
  }
  func.func @transform_4(%arg0: i32) -> (i32, i32) {
    %c0_i32 = arith.constant 0 : i32
    %c0_i32_0 = arith.constant 0 : i32
    %c0_i32_1 = arith.constant 0 : i32
    return %c0_i32, %c0_i32_0 : i32, i32
  }
  func.func @transform_5(%arg0: i32) -> (i32, i32) {
    %c0_i32 = arith.constant 0 : i32
    %c0_i32_0 = arith.constant 0 : i32
    %c0_i32_1 = arith.constant 0 : i32
    return %c0_i32, %c0_i32_0 : i32, i32
  }
  func.func @transform_6(%arg0: i32) -> (i32, i32) {
    %c0_i32 = arith.constant 0 : i32
    %c0_i32_0 = arith.constant 0 : i32
    %c0_i32_1 = arith.constant 0 : i32
    return %c0_i32, %c0_i32_0 : i32, i32
  }
  func.func @transform_7(%arg0: i32) -> (i32, i32) {
    %c0_i32 = arith.constant 0 : i32
    %c0_i32_0 = arith.constant 0 : i32
    %c0_i32_1 = arith.constant 0 : i32
    return %c0_i32, %c0_i32_0 : i32, i32
  }
  func.func @transform_8(%arg0: i32) -> (i32, i32, i32) {
    %c0_i32 = arith.constant 0 : i32
    %c0_i32_0 = arith.constant 0 : i32
    %c0_i32_1 = arith.constant 0 : i32
    return %arg0, %c0_i32, %c0_i32_0 : i32, i32, i32
  }
  func.func @transform_9(%arg0: i32) -> (i32, i32, i32) {
    %c0_i32 = arith.constant 0 : i32
    %c0_i32_0 = arith.constant 0 : i32
    %c0_i32_1 = arith.constant 0 : i32
    return %arg0, %c0_i32, %c0_i32_0 : i32, i32, i32
  }
}

</mosaic_0001>

<llo_original>
// kernel: tpu_custom_call.1
$region0: #{tpu_custom_call.1}
  #allocation0 [shape = 'u32[]', space=smem, size = 0x4, offset = 0x4, fixed_abs, tag = 'smem constant byte address 0x4 - core index']
  #allocation1 [shape = 'u32[144,128]{1,0:T(1,128)}', space=vmem, size = 0x12000, scoped, tag = 'internal scratch']
  %s0 = inlined_call_operand.hbm [shape: f32[2,8,120], index: 0, kind: input, shape index: {}]
  %s1 = inlined_call_operand.vmem [shape: bf16[120,384], index: 1, kind: input, shape index: {}]
  %s2 = inlined_call_operand.vmem [shape: f32[1,384], index: 2, kind: input, shape index: {}]
  %s3 = inlined_call_operand.vmem [shape: bf16[4,32,120], index: 3, kind: input, shape index: {}]
  %s4 = inlined_call_operand.vmem [shape: bf16[120,512], index: 4, kind: input, shape index: {}]
  %s5 = inlined_call_operand.vmem [shape: f32[1,512], index: 5, kind: input, shape index: {}]
  %s6 = inlined_call_operand.vmem [shape: bf16[512,120], index: 6, kind: input, shape index: {}]
  %s7 = inlined_call_operand.vmem [shape: f32[8,120], index: 7, kind: input, shape index: {}]
  %s8 = inlined_call_operand.hbm [shape: f32[2,8,120], index: 8, kind: output, shape index: {0}]
  %s9 = inlined_call_operand.hbm [shape: f32[2,1,8], index: 9, kind: output, shape index: {1}]
  %10 = xla_tuple %s8, %s9
  %s11 = sld [smem:[#allocation0]]
  $region77: #{tpu_custom_call.1} parent=0
    _
  %s13 = ssub.s32 1, %s11
  %s14 = scalar_select 0, %s13, %s11
  $region1: #{tpu_custom_call.1} parent=0
    #allocation2 [shape = 'u8[8192]{0}', space=vmem, size = 0x2000, scoped, tag = 'input window, operand 0']
    #allocation3 [shape = 's32[2]{0}', space=sflag, size = 0x8, scoped, tag = 'scoped memory for tpu_custom_call.1']
    #allocation4 [shape = 's32[2]{0}', space=sflag, size = 0x8, scoped, tag = 'scoped memory for tpu_custom_call.1']
    #allocation5 [shape = 'u8[8192]{0}', space=vmem, size = 0x2000, scoped, tag = 'output window, operand 0']
    #allocation6 [shape = 'u8[1024]{0}', space=vmem, size = 0x400, scoped, tag = 'output window, operand 1']
    #allocation7 [shape = 's32[2]{0}', space=sflag, size = 0x8, scoped, tag = 'scoped memory for tpu_custom_call.1']
    %15 = vsyncpa [#allocation3], 0
    %s16 = scalar_lea.sflag [#allocation3], 1
    %17 = vsyncpa %s16, 0
    %18 = vsyncpa [#allocation4], 0
    %s19 = scalar_lea.sflag [#allocation4], 1
    %20 = vsyncpa %s19, 0
    %21 = vsyncpa [#allocation7], 0
    %s22 = scalar_lea.sflag [#allocation7], 1
    %23 = vsyncpa %s22, 0
    loop: start=0, step=1, limit=4
    $region2: #{tpu_custom_call.1} parent=1 // loop_pre_header
      _
    $region3: #{tpu_custom_call.1} parent=1 // loop_header
      %s25 = sphi 0, %s29
      %p26 = scmp.ge.s32.totalorder %s25, 4
      %s35 = sphi 0, %s37
      %s38 = sphi 0, %s35
      %s39 = sphi 0, %s38
      %s55 = sphi 0, %s39
      %s59 = sphi 0, %s59
      %s61 = sphi 0, %s59
      %s62 = sphi 0, %s61
      %s76 = sphi 0, %s62
      %s80 = sphi 0, %s80
      %s82 = sphi 0, %s80
      %s83 = sphi 0, %s82
      %s97 = sphi 0, %s83
      %s101 = sphi 0, %s101
      %s103 = sphi 0, %s101
      %s104 = sphi 0, %s103
      %s118 = sphi 0, %s104
      %s122 = sphi 0, %s122
      %s124 = sphi 0, %s122
      %s125 = sphi 0, %s124
      %s139 = sphi 0, %s125
      %s143 = sphi 0, %s143
      %s145 = sphi 0, %s143
      %s146 = sphi 0, %s145
      %s160 = sphi 0, %s146
      %s164 = sphi 0, %s164
      %s166 = sphi 0, %s164
      %s167 = sphi 0, %s166
      %s181 = sphi 0, %s167
      %s185 = sphi 0, %s185
      %s187 = sphi 0, %s185
      %s188 = sphi 0, %s187
      %s202 = sphi 0, %s188
      %s208 = sphi 0, %s210
      %s211 = sphi 0, %s208
      %s212 = sphi 0, %s211
      %s228 = sphi 0, %s212
      %s234 = sphi 0, %s236
      %s237 = sphi 0, %s234
      %s238 = sphi 0, %s237
      %s254 = sphi 0, %s238
    $region4: #{tpu_custom_call.1} parent=1 // loop_header_branch
      %28 = sbr.rel (%p26) target = $region8
    $region5: #{tpu_custom_call.1} parent=1 // loop_body
      %s30 = ssub.s32 %s25, 1
      %s31 = ssub.s32 %s25, 2
      %s32 = sadd.s32 %s25, 1
      %s33 = ssub.s32 %s25, %s32
      %p34 = scmp.eq.s32.totalorder %s33, 0
      %s36 = sadd.s32 %s35, 1
      %s37 = scalar_select %p34, %s35, %s36
      %p40 = pneg %p34
      %p41 = scmp.eq.s32.totalorder %s25, 1
      %p42 = por %p40, %p41
      %p43 = scmp.ne.s32.totalorder %s35, %s38
      %p44 = scmp.eq.s32.totalorder %s25, 0
      %p45 = por %p43, %p44
      %p46 = scmp.ne.s32.totalorder %s35, %s38
      %p47 = scmp.eq.s32.totalorder %s30, 1
      %p48 = por %p46, %p47
      %p49 = scmp.ne.s32.totalorder %s38, %s39
      %p50 = scmp.eq.s32.totalorder %s30, 0
      %p51 = por %p49, %p50
      %p52 = scmp.ne.s32.totalorder %s38, %s39
      %p53 = scmp.eq.s32.totalorder %s31, 1
      %p54 = por %p52, %p53
      %p56 = scmp.ne.s32.totalorder %s39, %s55
      %p57 = scmp.eq.s32.totalorder %s31, 0
      %p58 = por %p56, %p57
      %s60 = sadd.s32 %s59, 1
      %p63 = scmp.eq.s32.totalorder %s25, 1
      %p64 = scmp.ne.s32.totalorder %s59, %s61
      %p65 = scmp.eq.s32.totalorder %s25, 0
      %p66 = por %p64, %p65
      %p67 = scmp.ne.s32.totalorder %s59, %s61
      %p68 = scmp.eq.s32.totalorder %s30, 1
      %p69 = por %p67, %p68
      %p70 = scmp.ne.s32.totalorder %s61, %s62
      %p71 = scmp.eq.s32.totalorder %s30, 0
      %p72 = por %p70, %p71
      %p73 = scmp.ne.s32.totalorder %s61, %s62
      %p74 = scmp.eq.s32.totalorder %s31, 1
      %p75 = por %p73, %p74
      %p77 = scmp.ne.s32.totalorder %s62, %s76
      %p78 = scmp.eq.s32.totalorder %s31, 0
      %p79 = por %p77, %p78
      %s81 = sadd.s32 %s80, 1
      %p84 = scmp.eq.s32.totalorder %s25, 1
      %p85 = scmp.ne.s32.totalorder %s80, %s82
      %p86 = scmp.eq.s32.totalorder %s25, 0
      %p87 = por %p85, %p86
      %p88 = scmp.ne.s32.totalorder %s80, %s82
      %p89 = scmp.eq.s32.totalorder %s30, 1
      %p90 = por %p88, %p89
      %p91 = scmp.ne.s32.totalorder %s82, %s83
      %p92 = scmp.eq.s32.totalorder %s30, 0
      %p93 = por %p91, %p92
      %p94 = scmp.ne.s32.totalorder %s82, %s83
      %p95 = scmp.eq.s32.totalorder %s31, 1
      %p96 = por %p94, %p95
      %p98 = scmp.ne.s32.totalorder %s83, %s97
      %p99 = scmp.eq.s32.totalorder %s31, 0
      %p100 = por %p98, %p99
      %s102 = sadd.s32 %s101, 1
      %p105 = scmp.eq.s32.totalorder %s25, 1
      %p106 = scmp.ne.s32.totalorder %s101, %s103
      %p107 = scmp.eq.s32.totalorder %s25, 0
      %p108 = por %p106, %p107
      %p109 = scmp.ne.s32.totalorder %s101, %s103
      %p110 = scmp.eq.s32.totalorder %s30, 1
      %p111 = por %p109, %p110
      %p112 = scmp.ne.s32.totalorder %s103, %s104
      %p113 = scmp.eq.s32.totalorder %s30, 0
      %p114 = por %p112, %p113
      %p115 = scmp.ne.s32.totalorder %s103, %s104
      %p116 = scmp.eq.s32.totalorder %s31, 1
      %p117 = por %p115, %p116
      %p119 = scmp.ne.s32.totalorder %s104, %s118
      %p120 = scmp.eq.s32.totalorder %s31, 0
      %p121 = por %p119, %p120
      %s123 = sadd.s32 %s122, 1
      %p126 = scmp.eq.s32.totalorder %s25, 1
      %p127 = scmp.ne.s32.totalorder %s122, %s124
      %p128 = scmp.eq.s32.totalorder %s25, 0
      %p129 = por %p127, %p128
      %p130 = scmp.ne.s32.totalorder %s122, %s124
      %p131 = scmp.eq.s32.totalorder %s30, 1
      %p132 = por %p130, %p131
      %p133 = scmp.ne.s32.totalorder %s124, %s125
      %p134 = scmp.eq.s32.totalorder %s30, 0
      %p135 = por %p133, %p134
      %p136 = scmp.ne.s32.totalorder %s124, %s125
      %p137 = scmp.eq.s32.totalorder %s31, 1
      %p138 = por %p136, %p137
      %p140 = scmp.ne.s32.totalorder %s125, %s139
      %p141 = scmp.eq.s32.totalorder %s31, 0
      %p142 = por %p140, %p141
      %s144 = sadd.s32 %s143, 1
      %p147 = scmp.eq.s32.totalorder %s25, 1
      %p148 = scmp.ne.s32.totalorder %s143, %s145
      %p149 = scmp.eq.s32.totalorder %s25, 0
      %p150 = por %p148, %p149
      %p151 = scmp.ne.s32.totalorder %s143, %s145
      %p152 = scmp.eq.s32.totalorder %s30, 1
      %p153 = por %p151, %p152
      %p154 = scmp.ne.s32.totalorder %s145, %s146
      %p155 = scmp.eq.s32.totalorder %s30, 0
      %p156 = por %p154, %p155
      %p157 = scmp.ne.s32.totalorder %s145, %s146
      %p158 = scmp.eq.s32.totalorder %s31, 1
      %p159 = por %p157, %p158
      %p161 = scmp.ne.s32.totalorder %s146, %s160
      %p162 = scmp.eq.s32.totalorder %s31, 0
      %p163 = por %p161, %p162
      %s165 = sadd.s32 %s164, 1
      %p168 = scmp.eq.s32.totalorder %s25, 1
      %p169 = scmp.ne.s32.totalorder %s164, %s166
      %p170 = scmp.eq.s32.totalorder %s25, 0
      %p171 = por %p169, %p170
      %p172 = scmp.ne.s32.totalorder %s164, %s166
      %p173 = scmp.eq.s32.totalorder %s30, 1
      %p174 = por %p172, %p173
      %p175 = scmp.ne.s32.totalorder %s166, %s167
      %p176 = scmp.eq.s32.totalorder %s30, 0
      %p177 = por %p175, %p176
      %p178 = scmp.ne.s32.totalorder %s166, %s167
      %p179 = scmp.eq.s32.totalorder %s31, 1
      %p180 = por %p178, %p179
      %p182 = scmp.ne.s32.totalorder %s167, %s181
      %p183 = scmp.eq.s32.totalorder %s31, 0
      %p184 = por %p182, %p183
      %s186 = sadd.s32 %s185, 1
      %p189 = scmp.eq.s32.totalorder %s25, 1
      %p190 = scmp.ne.s32.totalorder %s185, %s187
      %p191 = scmp.eq.s32.totalorder %s25, 0
      %p192 = por %p190, %p191
      %p193 = scmp.ne.s32.totalorder %s185, %s187
      %p194 = scmp.eq.s32.totalorder %s30, 1
      %p195 = por %p193, %p194
      %p196 = scmp.ne.s32.totalorder %s187, %s188
      %p197 = scmp.eq.s32.totalorder %s30, 0
      %p198 = por %p196, %p197
      %p199 = scmp.ne.s32.totalorder %s187, %s188
      %p200 = scmp.eq.s32.totalorder %s31, 1
      %p201 = por %p199, %p200
      %p203 = scmp.ne.s32.totalorder %s188, %s202
      %p204 = scmp.eq.s32.totalorder %s31, 0
      %p205 = por %p203, %p204
      %s206 = ssub.s32 %s25, %s32
      %p207 = scmp.eq.s32.totalorder %s206, 0
      %s209 = sadd.s32 %s208, 1
      %s210 = scalar_select %p207, %s208, %s209
      %p213 = pneg %p207
      %p214 = scmp.eq.s32.totalorder %s25, 1
      %p215 = por %p213, %p214
      %p216 = scmp.ne.s32.totalorder %s208, %s211
      %p217 = scmp.eq.s32.totalorder %s25, 0
      %p218 = por %p216, %p217
      %p219 = scmp.ne.s32.totalorder %s208, %s211
      %p220 = scmp.eq.s32.totalorder %s30, 1
      %p221 = por %p219, %p220
      %p222 = scmp.ne.s32.totalorder %s211, %s212
      %p223 = scmp.eq.s32.totalorder %s30, 0
      %p224 = por %p222, %p223
      %p225 = scmp.ne.s32.totalorder %s211, %s212
      %p226 = scmp.eq.s32.totalorder %s31, 1
      %p227 = por %p225, %p226
      %p229 = scmp.ne.s32.totalorder %s212, %s228
      %p230 = scmp.eq.s32.totalorder %s31, 0
      %p231 = por %p229, %p230
      %s232 = ssub.s32 %s25, %s32
      %p233 = scmp.eq.s32.totalorder %s232, 0
      %s235 = sadd.s32 %s234, 1
      %s236 = scalar_select %p233, %s234, %s235
      %p239 = pneg %p233
      %p240 = scmp.eq.s32.totalorder %s25, 1
      %p241 = por %p239, %p240
      %p242 = scmp.ne.s32.totalorder %s234, %s237
      %p243 = scmp.eq.s32.totalorder %s25, 0
      %p244 = por %p242, %p243
      %p245 = scmp.ne.s32.totalorder %s234, %s237
      %p246 = scmp.eq.s32.totalorder %s30, 1
      %p247 = por %p245, %p246
      %p248 = scmp.ne.s32.totalorder %s237, %s238
      %p249 = scmp.eq.s32.totalorder %s30, 0
      %p250 = por %p248, %p249
      %p251 = scmp.ne.s32.totalorder %s237, %s238
      %p252 = scmp.eq.s32.totalorder %s31, 1
      %p253 = por %p251, %p252
      %p255 = scmp.ne.s32.totalorder %s238, %s254
      %p256 = scmp.eq.s32.totalorder %s31, 0
      %p257 = por %p255, %p256
      %p258 = scmp.le.s32.totalorder 1, %s25
      %p259 = scmp.lt.s32.totalorder %s25, 3
      %p260 = pnand %p258, %p259
      %p261 = pneg %p260
      // Predicated region
      $region9: #{tpu_custom_call.1} parent=5 // pred_check
        _
      $region10: #{tpu_custom_call.1} parent=5 // pred_check_branch
        %263 = sbr.rel (%p260) target = $region12
      $region11: #{tpu_custom_call.1} parent=5 // pred_region
        %s264 = ssub.s32 %s25, 1
        // Predicated region
        $region13: #{tpu_custom_call.1} parent=11 // pred_check
          %p265 = pneg %p72
        $region14: #{tpu_custom_call.1} parent=11 // pred_check_branch
          %267 = sbr.rel (%p265) target = $region16
        $region15: #{tpu_custom_call.1} parent=11 // pred_region
          _
        $region16: #{tpu_custom_call.1} parent=11 // pred_fallthru
          _
        // Predicated region
        $region17: #{tpu_custom_call.1} parent=11 // pred_check
          %p268 = pneg %p93
        $region18: #{tpu_custom_call.1} parent=11 // pred_check_branch
          %270 = sbr.rel (%p268) target = $region20
        $region19: #{tpu_custom_call.1} parent=11 // pred_region
          _
        $region20: #{tpu_custom_call.1} parent=11 // pred_fallthru
          _
        // Predicated region
        $region21: #{tpu_custom_call.1} parent=11 // pred_check
          %p271 = pneg %p114
        $region22: #{tpu_custom_call.1} parent=11 // pred_check_branch
          %273 = sbr.rel (%p271) target = $region24
        $region23: #{tpu_custom_call.1} parent=11 // pred_region
          _
        $region24: #{tpu_custom_call.1} parent=11 // pred_fallthru
          _
        // Predicated region
        $region25: #{tpu_custom_call.1} parent=11 // pred_check
          %p274 = pneg %p135
        $region26: #{tpu_custom_call.1} parent=11 // pred_check_branch
          %276 = sbr.rel (%p274) target = $region28
        $region27: #{tpu_custom_call.1} parent=11 // pred_region
          _
        $region28: #{tpu_custom_call.1} parent=11 // pred_fallthru
          _
        // Predicated region
        $region29: #{tpu_custom_call.1} parent=11 // pred_check
          %p277 = pneg %p156
        $region30: #{tpu_custom_call.1} parent=11 // pred_check_branch
          %279 = sbr.rel (%p277) target = $region32
        $region31: #{tpu_custom_call.1} parent=11 // pred_region
          _
        $region32: #{tpu_custom_call.1} parent=11 // pred_fallthru
          _
        // Predicated region
        $region33: #{tpu_custom_call.1} parent=11 // pred_check
          %p280 = pneg %p177
        $region34: #{tpu_custom_call.1} parent=11 // pred_check_branch
          %282 = sbr.rel (%p280) target = $region36
        $region35: #{tpu_custom_call.1} parent=11 // pred_region
          _
        $region36: #{tpu_custom_call.1} parent=11 // pred_fallthru
          _
        // Predicated region
        $region37: #{tpu_custom_call.1} parent=11 // pred_check
          %p283 = pneg %p198
        $region38: #{tpu_custom_call.1} parent=11 // pred_check_branch
          %285 = sbr.rel (%p283) target = $region40
        $region39: #{tpu_custom_call.1} parent=11 // pred_region
          _
        $region40: #{tpu_custom_call.1} parent=11 // pred_fallthru
          _
      $region12: #{tpu_custom_call.1} parent=5 // pred_fallthru
        _
      %p286 = scmp.lt.s32.totalorder %s25, 2
      // Predicated region
      $region41: #{tpu_custom_call.1} parent=5 // pred_check
        %p287 = pneg %p286
      $region42: #{tpu_custom_call.1} parent=5 // pred_check_branch
        %289 = sbr.rel (%p287) target = $region44
      $region43: #{tpu_custom_call.1} parent=5 // pred_region
        // Predicated region
        $region45: #{tpu_custom_call.1} parent=43 // pred_check
          %p290 = pneg %p45
        $region46: #{tpu_custom_call.1} parent=43 // pred_check_branch
          %292 = sbr.rel (%p290) target = $region48
        $region47: #{tpu_custom_call.1} parent=43 // pred_region
          %s293 = sand.u32 %s35, 1
          %s294 = scalar_lea.sflag [#allocation3], %s293
          %s295 = sand.u32 %s35, 1
          %s296 = smul.addr %s295, 8
          %s297 = scalar_lea.vmem [#allocation2], %s296
          %s299 = ssub.s32 128, 128
          %300 = vsyncadd %s294, %s299
          %s301 = smul.addr %s25, 128
          %s302 = scalar_lea.hbm %s0, %s301
          %s304 = sshll.u32 %s297, 4
          %s305 = int_to_ptr.vmem [resolvable:$true] %s304
          %307 = dma.hbm_to_vmem [thread:$0]  %s302, 128, %s305, %s294
        $region48: #{tpu_custom_call.1} parent=43 // pred_fallthru
          _
      $region44: #{tpu_custom_call.1} parent=5 // pred_fallthru
        _
      %p308 = scmp.le.s32.totalorder 1, %s25
      %p309 = scmp.lt.s32.totalorder %s25, 3
      %p310 = pnand %p308, %p309
      %p311 = pneg %p310
      // Predicated region
      $region49: #{tpu_custom_call.1} parent=5 // pred_check
        _
      $region50: #{tpu_custom_call.1} parent=5 // pred_check_branch
        %313 = sbr.rel (%p310) target = $region52
      $region51: #{tpu_custom_call.1} parent=5 // pred_region
        %s314 = ssub.s32 %s25, 1
        %s315 = sand.u32 %s38, 1
        %s316 = scalar_lea.sflag [#allocation3], %s315
        %s317 = sand.u32 %s38, 1
        %s318 = smul.addr %s317, 8
        %s319 = scalar_lea.vmem [#allocation2], %s318
        // Predicated region
        $region53: #{tpu_custom_call.1} parent=51 // pred_check
          %p320 = pneg %p51
        $region54: #{tpu_custom_call.1} parent=51 // pred_check_branch
          %322 = sbr.rel (%p320) target = $region56
        $region55: #{tpu_custom_call.1} parent=51 // pred_region
          %323 = dma.done %s316, 128
        $region56: #{tpu_custom_call.1} parent=51 // pred_fallthru
          _
        %s324 = sand.u32 %s38, 1
        %s325 = scalar_lea.sflag [#allocation3], %s324
        %s326 = sand.u32 %s38, 1
        %s327 = smul.addr %s326, 8
        %s328 = scalar_lea.vmem [#allocation2], %s327
        %p329 = pneg %p51
        %p330 = pneg %p48
        %p331 = pneg %p72
        %p332 = pneg %p69
        %p333 = pneg %p93
        %p334 = pneg %p90
        %p335 = pneg %p114
        %p336 = pneg %p111
        %p337 = pneg %p135
        %p338 = pneg %p132
        %p339 = pneg %p156
        %p340 = pneg %p153
        %p341 = pneg %p177
        %p342 = pneg %p174
        %p343 = pneg %p198
        %p344 = pneg %p195
        %p345 = pneg %p224
        %p346 = pneg %p221
        %s347 = sand.u32 %s211, 1
        %s348 = scalar_lea.sflag [#allocation4], %s347
        %s349 = sand.u32 %s211, 1
        %s350 = smul.addr %s349, 8
        %s351 = scalar_lea.vmem [#allocation5], %s350
        %p352 = pneg %p250
        %p353 = pneg %p247
        %s354 = sand.u32 %s237, 1
        %s355 = scalar_lea.sflag [#allocation7], %s354
        %s356 = sand.u32 %s237, 1
        %s357 = scalar_lea.vmem [#allocation6], %s356
        %v359 = vld [vmem:[%s319] sm:$0xff]
        %v360 = vld [vmem:[%s7] sm:$0x1]
        %v361 = vld [vmem:[%s7 + $0x1] sm:$0x1]
        %v362 = vld [vmem:[%s7 + $0x2] sm:$0x1]
        %v363 = vld [vmem:[%s7 + $0x3] sm:$0x1]
        %v364 = vld [vmem:[%s7 + $0x4] sm:$0x1]
        %v365 = vld [vmem:[%s7 + $0x5] sm:$0x1]
        %v366 = vpack.c.bf16 %v359, %v359
        %v367 = vld [vmem:[%s1] sm:$0xff]
        %v368 = vld [vmem:[%s1 + $0x8] sm:$0xf]
        %v369 = vld [vmem:[%s1 + $0xc] sm:$0xff]
        %v370 = vld [vmem:[%s1 + $0x14] sm:$0xf]
        %v371 = vld [vmem:[%s1 + $0x18] sm:$0xff]
        %v372 = vld [vmem:[%s1 + $0x20] sm:$0xf]
        %v373 = vld [vmem:[%s1 + $0x24] sm:$0xff]
        %v374 = vld [vmem:[%s1 + $0x2c] sm:$0xf]
        %v375 = vld [vmem:[%s1 + $0x30] sm:$0xff]
        %v376 = vld [vmem:[%s1 + $0x38] sm:$0xf]
        %v377 = vld [vmem:[%s1 + $0x3c] sm:$0xff]
        %v378 = vld [vmem:[%s1 + $0x44] sm:$0xf]
        %v379 = vld [vmem:[%s1 + $0x48] sm:$0xff]
        %v380 = vld [vmem:[%s1 + $0x50] sm:$0xf]
        %v381 = vld [vmem:[%s1 + $0x54] sm:$0xff]
        %v382 = vld [vmem:[%s1 + $0x5c] sm:$0xf]
        %v383 = vld [vmem:[%s1 + $0x60] sm:$0xff]
        %v384 = vld [vmem:[%s1 + $0x68] sm:$0xf]
        %v385 = vld [vmem:[%s1 + $0x6c] sm:$0xff]
        %v386 = vld [vmem:[%s1 + $0x74] sm:$0xf]
        %v387 = vld [vmem:[%s1 + $0x78] sm:$0xff]
        %v388 = vld [vmem:[%s1 + $0x80] sm:$0xf]
        %v389 = vld [vmem:[%s1 + $0x84] sm:$0xff]
        %v390 = vld [vmem:[%s1 + $0x8c] sm:$0xf]
        %v391 = vld [vmem:[%s1 + $0x90] sm:$0xff]
        %v392 = vld [vmem:[%s1 + $0x98] sm:$0xf]
        %v393 = vld [vmem:[%s1 + $0x9c] sm:$0xff]
        %v394 = vld [vmem:[%s1 + $0xa4] sm:$0xf]
        %v395 = vld [vmem:[%s1 + $0xa8] sm:$0xff]
        %v396 = vld [vmem:[%s1 + $0xb0] sm:$0xf]
        %v397 = vld [vmem:[%s2] sm:$0x7]
        %v399 = vlaneseq
        %v400 = vshrl.u32 %v399, 7
        %v401 = vsub.s32 0, %v400
        %v402 = vrot.slane %v397, %v401
        %v403 = vlaneseq
        %v404 = vshrl.u32 %v403, 7
        %v405 = vsub.s32 1, %v404
        %v406 = vrot.slane %v397, %v405
        %v407 = vlaneseq
        %v408 = vshrl.u32 %v407, 7
        %v409 = vsub.s32 2, %v408
        %v410 = vrot.slane %v397, %v409
        %v444 = vunpack.c.l.b16 %v367
        %v445 = vunpack.c.h.b16 %v367
        %v446 = vunpack.c.l.b16 %v368
        %v447 = vunpack.c.l.b16 %v369
        %v448 = vunpack.c.h.b16 %v369
        %v449 = vunpack.c.l.b16 %v370
        %v450 = vunpack.c.l.b16 %v371
        %v451 = vunpack.c.h.b16 %v371
        %v452 = vunpack.c.l.b16 %v372
        %v453 = vunpack.c.l.b16 %v373
        %v454 = vunpack.c.h.b16 %v373
        %v455 = vunpack.c.l.b16 %v374
        %v456 = vunpack.c.l.b16 %v375
        %v457 = vunpack.c.h.b16 %v375
        %v458 = vunpack.c.l.b16 %v376
        %v459 = vunpack.c.l.b16 %v377
        %v460 = vunpack.c.h.b16 %v377
        %v461 = vunpack.c.l.b16 %v378
        %v462 = vunpack.c.l.b16 %v379
        %v463 = vunpack.c.h.b16 %v379
        %v464 = vunpack.c.l.b16 %v380
        %v465 = vunpack.c.l.b16 %v381
        %v466 = vunpack.c.h.b16 %v381
        %v467 = vunpack.c.l.b16 %v382
        %v468 = vunpack.c.l.b16 %v383
        %v469 = vunpack.c.h.b16 %v383
        %v470 = vunpack.c.l.b16 %v384
        %v471 = vunpack.c.l.b16 %v385
        %v472 = vunpack.c.h.b16 %v385
        %v473 = vunpack.c.l.b16 %v386
        %v474 = vunpack.c.l.b16 %v387
        %v475 = vunpack.c.h.b16 %v387
        %v476 = vunpack.c.l.b16 %v388
        %v477 = vunpack.c.l.b16 %v389
        %v478 = vunpack.c.h.b16 %v389
        %v479 = vunpack.c.l.b16 %v390
        %v480 = vunpack.c.l.b16 %v391
        %v481 = vunpack.c.h.b16 %v391
        %v482 = vunpack.c.l.b16 %v392
        %v483 = vunpack.c.l.b16 %v393
        %v484 = vunpack.c.h.b16 %v393
        %v485 = vunpack.c.l.b16 %v394
        %v486 = vunpack.c.l.b16 %v395
        %v487 = vunpack.c.h.b16 %v395
        %v488 = vunpack.c.l.b16 %v396
        %v489 = vpack.c.b16 %v447, %v444
        %v490 = vpack.c.b16 %v448, %v445
        %v491 = vpack.c.b16 %v449, %v446
        %v492 = vpack.c.b16 %v453, %v450
        %v493 = vpack.c.b16 %v454, %v451
        %v494 = vpack.c.b16 %v455, %v452
        %v495 = vpack.c.b16 %v459, %v456
        %v496 = vpack.c.b16 %v460, %v457
        %v497 = vpack.c.b16 %v461, %v458
        %v498 = vpack.c.b16 %v465, %v462
        %v499 = vpack.c.b16 %v466, %v463
        %v500 = vpack.c.b16 %v467, %v464
        %v501 = vpack.c.b16 %v471, %v468
        %v502 = vpack.c.b16 %v472, %v469
        %v503 = vpack.c.b16 %v473, %v470
        %v504 = vpack.c.b16 %v477, %v474
        %v505 = vpack.c.b16 %v478, %v475
        %v506 = vpack.c.b16 %v479, %v476
        %v507 = vpack.c.b16 %v483, %v480
        %v508 = vpack.c.b16 %v484, %v481
        %v509 = vpack.c.b16 %v485, %v482
        %v510 = vpack.c.b16 %v486, %v486
        %v511 = vpack.c.b16 %v487, %v487
        %v512 = vpack.c.b16 %v488, %v488
        %vm534 = vcmask 982016
        %v536 = vsel %vm534, %v366, 0
        %vm538 = vcmask 1043456
        %v540 = vsel %vm538, %v510, 0
        %v543 = vsel %vm538, %v511, 0
        %v546 = vsel %vm538, %v512, 0
        %548 = vmatprep.subr.bf16.mxu0 %v490
        %549 = vmatpush1.bf16.msra.mxu0 %v489
        %550 = vmatprep.subr.bf16.mxu0 %v493
        %551 = vmatpush1.bf16.msra.mxu0 %v492
        %552 = vmatprep.subr.bf16.mxu0 %v496
        %553 = vmatpush1.bf16.msra.mxu0 %v495
        %554 = vmatprep.subr.bf16.mxu0 %v499
        %555 = vmatpush1.bf16.msra.mxu0 %v498
        %556 = vmatprep.subr.bf16.mxu0 %v502
        %557 = vmatpush1.bf16.msra.mxu0 %v501
        %558 = vmatprep.subr.bf16.mxu0 %v505
        %559 = vmatpush1.bf16.msra.mxu0 %v504
        %560 = vmatprep.subr.bf16.mxu0 %v508
        %561 = vmatpush1.bf16.msra.mxu0 %v507
        %562 = vmatprep.subr.bf16.mxu0 %v543
        %563 = vmatpush1.bf16.msra.mxu0 %v540
        %564 = vmatprep.subr.bf16.mxu0 0
        %565 = vmatpush1.bf16.msra.mxu0 0
        %566 = vmatprep.subr.bf16.mxu0 0
        %567 = vmatpush1.bf16.msra.mxu0 0
        %568 = vmatprep.subr.bf16.mxu0 0
        %569 = vmatpush1.bf16.msra.mxu0 0
        %570 = vmatprep.subr.bf16.mxu0 0
        %571 = vmatpush1.bf16.msra.mxu0 0
        %572 = vmatprep.subr.bf16.mxu0 0
        %573 = vmatpush1.bf16.msra.mxu0 0
        %574 = vmatprep.subr.bf16.mxu0 0
        %575 = vmatpush1.bf16.msra.mxu0 0
        %576 = vmatprep.subr.bf16.mxu0 0
        %577 = vmatpush1.bf16.msra.mxu0 0
        %578 = vmatprep.subr.bf16.mxu0 0
        %579 = vmatpush1.bf16.msra.mxu0 0
        %580 = vmatprep.mubr.bf16.mxu0 0
        %581 = vmatmul.mubr.bf16.gmra.mrb[0].mxu0 %v536
        %v582 = vpop.f32.mrb[0].mxu0
        %v583 = vadd.f32 %v402, %v582
        %v584 = vpop.f32.mrb[0].mxu0
        %v585 = vadd.f32 %v406, %v584
        %v586 = vpop.f32.mrb[0].mxu0
        %v587 = vpop.f32.mrb[0].mxu0
        %588 = vdwg.mxu0
        %589 = vmatprep.subr.bf16.mxu0 0
        %590 = vmatpush1.bf16.msra.mxu0 %v491
        %591 = vmatprep.subr.bf16.mxu0 0
        %592 = vmatpush1.bf16.msra.mxu0 %v494
        %593 = vmatprep.subr.bf16.mxu0 0
        %594 = vmatpush1.bf16.msra.mxu0 %v497
        %595 = vmatprep.subr.bf16.mxu0 0
        %596 = vmatpush1.bf16.msra.mxu0 %v500
        %597 = vmatprep.subr.bf16.mxu0 0
        %598 = vmatpush1.bf16.msra.mxu0 %v503
        %599 = vmatprep.subr.bf16.mxu0 0
        %600 = vmatpush1.bf16.msra.mxu0 %v506
        %601 = vmatprep.subr.bf16.mxu0 0
        %602 = vmatpush1.bf16.msra.mxu0 %v509
        %603 = vmatprep.subr.bf16.mxu0 0
        %604 = vmatpush1.bf16.msra.mxu0 %v546
        %605 = vmatprep.subr.bf16.mxu0 0
        %606 = vmatpush1.bf16.msra.mxu0 0
        %607 = vmatprep.subr.bf16.mxu0 0
        %608 = vmatpush1.bf16.msra.mxu0 0
        %609 = vmatprep.subr.bf16.mxu0 0
        %610 = vmatpush1.bf16.msra.mxu0 0
        %611 = vmatprep.subr.bf16.mxu0 0
        %612 = vmatpush1.bf16.msra.mxu0 0
        %613 = vmatprep.subr.bf16.mxu0 0
        %614 = vmatpush1.bf16.msra.mxu0 0
        %615 = vmatprep.subr.bf16.mxu0 0
        %616 = vmatpush1.bf16.msra.mxu0 0
        %617 = vmatprep.subr.bf16.mxu0 0
        %618 = vmatpush1.bf16.msra.mxu0 0
        %619 = vmatprep.subr.bf16.mxu0 0
        %620 = vmatpush1.bf16.msra.mxu0 0
        %621 = vmatprep.mubr.bf16.mxu0 0
        %622 = vmatmul.mubr.bf16.gmra.mrb[0].mxu0 %v536
        %v623 = vpop.f32.mrb[0].mxu0
        %v624 = vadd.f32 %v410, %v623
        %v625 = vpop.f32.mrb[0].mxu0
        %v626 = vpop.f32.mrb[0].mxu0
        %v627 = vpop.f32.mrb[0].mxu0
        %628 = vdwg.mxu0
        %v629 = vpack.c.bf16 %v583, %v583
        %v630 = vpack.c.bf16 %v585, %v585
        %v631 = vpack.c.bf16 %v624, %v624
        %vm632 = vcmask 261120
        %v634 = vsel %vm632, %v629, 0
        %v637 = vsel %vm632, %v630, 0
        %639 = vmatprep.subr.bf16.mxu0 0
        %640 = vmatpush1.bf16.xpose.msra.mxu0 %v637
        %641 = vmatprep.subr.bf16.mxu0 0
        %642 = vmatpush1.bf16.xpose.msra.mxu0 0
        %643 = vmatprep.subr.bf16.mxu0 0
        %644 = vmatpush1.bf16.xpose.msra.mxu0 0
        %645 = vmatprep.subr.bf16.mxu0 0
        %646 = vmatpush1.bf16.xpose.msra.mxu0 0
        %647 = vmatprep.subr.bf16.mxu0 0
        %648 = vmatpush1.bf16.xpose.msra.mxu0 0
        %649 = vmatprep.subr.bf16.mxu0 0
        %650 = vmatpush1.bf16.xpose.msra.mxu0 0
        %651 = vmatprep.subr.bf16.mxu0 0
        %652 = vmatpush1.bf16.xpose.msra.mxu0 0
        %653 = vmatprep.subr.bf16.mxu0 0
        %654 = vmatpush1.bf16.xpose.msra.mxu0 0
        %655 = vmatprep.subr.bf16.mxu0 0
        %656 = vmatpush1.bf16.xpose.msra.mxu0 0
        %657 = vmatprep.subr.bf16.mxu0 0
        %658 = vmatpush1.bf16.xpose.msra.mxu0 0
        %659 = vmatprep.subr.bf16.mxu0 0
        %660 = vmatpush1.bf16.xpose.msra.mxu0 0
        %661 = vmatprep.subr.bf16.mxu0 0
        %662 = vmatpush1.bf16.xpose.msra.mxu0 0
        %663 = vmatprep.subr.bf16.mxu0 0
        %664 = vmatpush1.bf16.xpose.msra.mxu0 0
        %665 = vmatprep.subr.bf16.mxu0 0
        %666 = vmatpush1.bf16.xpose.msra.mxu0 0
        %667 = vmatprep.subr.bf16.mxu0 0
        %668 = vmatpush1.bf16.xpose.msra.mxu0 0
        %669 = vmatprep.subr.bf16.mxu0 0
        %670 = vmatpush1.bf16.xpose.msra.mxu0 0
        %671 = vmatprep.mubr.bf16.mxu0 0
        %672 = vmatmul.mubr.bf16.gmra.mrb[0].mxu0 %v634
        %v673 = vpop.f32.mrb[0].mxu0
        %v674 = vadd.f32 0.0, %v673
        %v675 = vpop.f32.mrb[0].mxu0
        %v676 = vpop.f32.mrb[0].mxu0
        %v677 = vpop.f32.mrb[0].mxu0
        %678 = vdwg.mxu0
        %vm679 = vcmask 64512
        %v680 = vsel %vm679, %v674, -inf
        %681 = vmax.xlane.f32.xlu0 %v680
        %v682 = vpop.xlane.xlu0 %681
        %v683 = vsub.f32 %v674, %v682
        %v684 = vmul.f32 %v683, 1.442695
        %v685 = vpow.pop %v684
        %v686 = vsel %vm679, %v685, 0.0
        %687 = vadd.xlane.f32.xlu0 %v686
        %v688 = vpop.xlane.xlu0 %687
        %v689 = vrcp.pop %v688
        %v690 = vmul.f32 %v685, %v689
        %v691 = vadd.f32 %v690, 0.0
        %v692 = vpack.c.bf16 %v690, %v690
        %v694 = vsel %vm679, %v692, 0
        %v697 = vsel %vm538, %v631, 0
        %699 = vmatprep.subr.bf16.mxu0 0
        %700 = vmatpush1.bf16.msra.mxu0 %v697
        %701 = vmatprep.subr.bf16.mxu0 0
        %702 = vmatpush1.bf16.msra.mxu0 0
        %703 = vmatprep.subr.bf16.mxu0 0
        %704 = vmatpush1.bf16.msra.mxu0 0
        %705 = vmatprep.subr.bf16.mxu0 0
        %706 = vmatpush1.bf16.msra.mxu0 0
        %707 = vmatprep.subr.bf16.mxu0 0
        %708 = vmatpush1.bf16.msra.mxu0 0
        %709 = vmatprep.subr.bf16.mxu0 0
        %710 = vmatpush1.bf16.msra.mxu0 0
        %711 = vmatprep.subr.bf16.mxu0 0
        %712 = vmatpush1.bf16.msra.mxu0 0
        %713 = vmatprep.subr.bf16.mxu0 0
        %714 = vmatpush1.bf16.msra.mxu0 0
        %715 = vmatprep.subr.bf16.mxu0 0
        %716 = vmatpush1.bf16.msra.mxu0 0
        %717 = vmatprep.subr.bf16.mxu0 0
        %718 = vmatpush1.bf16.msra.mxu0 0
        %719 = vmatprep.subr.bf16.mxu0 0
        %720 = vmatpush1.bf16.msra.mxu0 0
        %721 = vmatprep.subr.bf16.mxu0 0
        %722 = vmatpush1.bf16.msra.mxu0 0
        %723 = vmatprep.subr.bf16.mxu0 0
        %724 = vmatpush1.bf16.msra.mxu0 0
        %725 = vmatprep.subr.bf16.mxu0 0
        %726 = vmatpush1.bf16.msra.mxu0 0
        %727 = vmatprep.subr.bf16.mxu0 0
        %728 = vmatpush1.bf16.msra.mxu0 0
        %729 = vmatprep.subr.bf16.mxu0 0
        %730 = vmatpush1.bf16.msra.mxu0 0
        %731 = vmatprep.mubr.bf16.mxu0 0
        %732 = vmatmul.mubr.bf16.gmra.mrb[0].mxu0 %v694
        %v733 = vpop.f32.mrb[0].mxu0
        %v734 = vadd.f32 0.0, %v733
        %v735 = vpop.f32.mrb[0].mxu0
        %v736 = vpop.f32.mrb[0].mxu0
        %v737 = vpop.f32.mrb[0].mxu0
        %738 = vdwg.mxu0
        %v739 = vpack.c.bf16 %v734, %v734
        %v740 = vld [vmem:[%s3] sm:$0xf]
        %v741 = vld [vmem:[%s3 + $0x4] sm:$0xf]
        %v742 = vld [vmem:[%s3 + $0x8] sm:$0xf]
        %v743 = vld [vmem:[%s3 + $0xc] sm:$0xf]
        %745 = vrot.lane.b32.xlu0 %v629, 96
        %v746 = vpop.permute.xlu0 %745
        %748 = vrot.lane.b32.xlu0 %v630, 96
        %v749 = vpop.permute.xlu0 %748
        %v751 = vsel %vm632, %v746, 0
        %v754 = vsel %vm632, %v749, 0
        %756 = vmatprep.subr.bf16.mxu0 0
        %757 = vmatpush1.bf16.xpose.msra.mxu0 %v754
        %758 = vmatprep.subr.bf16.mxu0 0
        %759 = vmatpush1.bf16.xpose.msra.mxu0 0
        %760 = vmatprep.subr.bf16.mxu0 0
        %761 = vmatpush1.bf16.xpose.msra.mxu0 0
        %762 = vmatprep.subr.bf16.mxu0 0
        %763 = vmatpush1.bf16.xpose.msra.mxu0 0
        %764 = vmatprep.subr.bf16.mxu0 0
        %765 = vmatpush1.bf16.xpose.msra.mxu0 0
        %766 = vmatprep.subr.bf16.mxu0 0
        %767 = vmatpush1.bf16.xpose.msra.mxu0 0
        %768 = vmatprep.subr.bf16.mxu0 0
        %769 = vmatpush1.bf16.xpose.msra.mxu0 0
        %770 = vmatprep.subr.bf16.mxu0 0
        %771 = vmatpush1.bf16.xpose.msra.mxu0 0
        %772 = vmatprep.subr.bf16.mxu0 0
        %773 = vmatpush1.bf16.xpose.msra.mxu0 0
        %774 = vmatprep.subr.bf16.mxu0 0
        %775 = vmatpush1.bf16.xpose.msra.mxu0 0
        %776 = vmatprep.subr.bf16.mxu0 0
        %777 = vmatpush1.bf16.xpose.msra.mxu0 0
        %778 = vmatprep.subr.bf16.mxu0 0
        %779 = vmatpush1.bf16.xpose.msra.mxu0 0
        %780 = vmatprep.subr.bf16.mxu0 0
        %781 = vmatpush1.bf16.xpose.msra.mxu0 0
        %782 = vmatprep.subr.bf16.mxu0 0
        %783 = vmatpush1.bf16.xpose.msra.mxu0 0
        %784 = vmatprep.subr.bf16.mxu0 0
        %785 = vmatpush1.bf16.xpose.msra.mxu0 0
        %786 = vmatprep.subr.bf16.mxu0 0
        %787 = vmatpush1.bf16.xpose.msra.mxu0 0
        %788 = vmatprep.mubr.bf16.mxu0 0
        %789 = vmatmul.mubr.bf16.gmra.mrb[0].mxu0 %v751
        %v790 = vpop.f32.mrb[0].mxu0
        %v791 = vadd.f32 0.0, %v790
        %v792 = vpop.f32.mrb[0].mxu0
        %v793 = vpop.f32.mrb[0].mxu0
        %v794 = vpop.f32.mrb[0].mxu0
        %795 = vdwg.mxu0
        %v796 = vsel %vm679, %v791, -inf
        %797 = vmax.xlane.f32.xlu0 %v796
        %v798 = vpop.xlane.xlu0 %797
        %v799 = vsub.f32 %v791, %v798
        %v800 = vmul.f32 %v799, 1.442695
        %v801 = vpow.pop %v800
        %v802 = vsel %vm679, %v801, 0.0
        %803 = vadd.xlane.f32.xlu0 %v802
        %v804 = vpop.xlane.xlu0 %803
        %v805 = vrcp.pop %v804
        %v806 = vmul.f32 %v801, %v805
        %v807 = vadd.f32 %v691, %v806
        %v808 = vpack.c.bf16 %v806, %v806
        %810 = vrot.lane.b32.xlu0 %v631, 96
        %v811 = vpop.permute.xlu0 %810
        %v813 = vsel %vm679, %v808, 0
        %v816 = vsel %vm538, %v811, 0
        %818 = vmatprep.subr.bf16.mxu0 0
        %819 = vmatpush1.bf16.msra.mxu0 %v816
        %820 = vmatprep.subr.bf16.mxu0 0
        %821 = vmatpush1.bf16.msra.mxu0 0
        %822 = vmatprep.subr.bf16.mxu0 0
        %823 = vmatpush1.bf16.msra.mxu0 0
        %824 = vmatprep.subr.bf16.mxu0 0
        %825 = vmatpush1.bf16.msra.mxu0 0
        %826 = vmatprep.subr.bf16.mxu0 0
        %827 = vmatpush1.bf16.msra.mxu0 0
        %828 = vmatprep.subr.bf16.mxu0 0
        %829 = vmatpush1.bf16.msra.mxu0 0
        %830 = vmatprep.subr.bf16.mxu0 0
        %831 = vmatpush1.bf16.msra.mxu0 0
        %832 = vmatprep.subr.bf16.mxu0 0
        %833 = vmatpush1.bf16.msra.mxu0 0
        %834 = vmatprep.subr.bf16.mxu0 0
        %835 = vmatpush1.bf16.msra.mxu0 0
        %836 = vmatprep.subr.bf16.mxu0 0
        %837 = vmatpush1.bf16.msra.mxu0 0
        %838 = vmatprep.subr.bf16.mxu0 0
        %839 = vmatpush1.bf16.msra.mxu0 0
        %840 = vmatprep.subr.bf16.mxu0 0
        %841 = vmatpush1.bf16.msra.mxu0 0
        %842 = vmatprep.subr.bf16.mxu0 0
        %843 = vmatpush1.bf16.msra.mxu0 0
        %844 = vmatprep.subr.bf16.mxu0 0
        %845 = vmatpush1.bf16.msra.mxu0 0
        %846 = vmatprep.subr.bf16.mxu0 0
        %847 = vmatpush1.bf16.msra.mxu0 0
        %848 = vmatprep.subr.bf16.mxu0 0
        %849 = vmatpush1.bf16.msra.mxu0 0
        %850 = vmatprep.mubr.bf16.mxu0 0
        %851 = vmatmul.mubr.bf16.gmra.mrb[0].mxu0 %v813
        %v852 = vpop.f32.mrb[0].mxu0
        %v853 = vadd.f32 0.0, %v852
        %v854 = vpop.f32.mrb[0].mxu0
        %v855 = vpop.f32.mrb[0].mxu0
        %v856 = vpop.f32.mrb[0].mxu0
        %857 = vdwg.mxu0
        %v858 = vpack.c.bf16 %v853, %v853
        %s859 = scalar_lea.vmem %s3, 16
        %v860 = vld [vmem:[%s859] sm:$0xf]
        %v861 = vld [vmem:[%s859 + $0x4] sm:$0xf]
        %v862 = vld [vmem:[%s859 + $0x8] sm:$0xf]
        %v863 = vld [vmem:[%s859 + $0xc] sm:$0xf]
        %v868 = vunpack.c.l.b16 %v860
        %v869 = vunpack.c.l.b16 %v861
        %v870 = vunpack.c.l.b16 %v862
        %v871 = vunpack.c.l.b16 %v863
        %v872 = vpack.c.b16 %v869, %v868
        %v873 = vpack.c.b16 %v871, %v870
        %v877 = vsel %vm632, %v858, 0
        %879 = vmatprep.subr.bf16.mxu0 0
        %880 = vmatpush1.bf16.msra.mxu0 %v872
        %881 = vmatprep.subr.bf16.mxu0 0
        %882 = vmatpush1.bf16.msra.mxu0 %v873
        %883 = vmatprep.subr.bf16.mxu0 0
        %884 = vmatpush1.bf16.msra.mxu0 0
        %885 = vmatprep.subr.bf16.mxu0 0
        %886 = vmatpush1.bf16.msra.mxu0 0
        %887 = vmatprep.subr.bf16.mxu0 0
        %888 = vmatpush1.bf16.msra.mxu0 0
        %889 = vmatprep.subr.bf16.mxu0 0
        %890 = vmatpush1.bf16.msra.mxu0 0
        %891 = vmatprep.subr.bf16.mxu0 0
        %892 = vmatpush1.bf16.msra.mxu0 0
        %893 = vmatprep.subr.bf16.mxu0 0
        %894 = vmatpush1.bf16.msra.mxu0 0
        %895 = vmatprep.subr.bf16.mxu0 0
        %896 = vmatpush1.bf16.msra.mxu0 0
        %897 = vmatprep.subr.bf16.mxu0 0
        %898 = vmatpush1.bf16.msra.mxu0 0
        %899 = vmatprep.subr.bf16.mxu0 0
        %900 = vmatpush1.bf16.msra.mxu0 0
        %901 = vmatprep.subr.bf16.mxu0 0
        %902 = vmatpush1.bf16.msra.mxu0 0
        %903 = vmatprep.subr.bf16.mxu0 0
        %904 = vmatpush1.bf16.msra.mxu0 0
        %905 = vmatprep.subr.bf16.mxu0 0
        %906 = vmatpush1.bf16.msra.mxu0 0
        %907 = vmatprep.subr.bf16.mxu0 0
        %908 = vmatpush1.bf16.msra.mxu0 0
        %909 = vmatprep.subr.bf16.mxu0 0
        %910 = vmatpush1.bf16.msra.mxu0 0
        %911 = vmatprep.mubr.bf16.mxu0 0
        %912 = vmatmul.mubr.bf16.gmra.mrb[0].mxu0 %v877
        %v913 = vpop.f32.mrb[0].mxu0
        %v914 = vadd.f32 0.0, %v913
        %v915 = vpop.f32.mrb[0].mxu0
        %v916 = vpop.f32.mrb[0].mxu0
        %v917 = vpop.f32.mrb[0].mxu0
        %918 = vdwg.mxu0
        %v923 = vunpack.c.l.b16 %v740
        %v924 = vunpack.c.l.b16 %v741
        %v925 = vunpack.c.l.b16 %v742
        %v926 = vunpack.c.l.b16 %v743
        %v927 = vpack.c.b16 %v924, %v923
        %v928 = vpack.c.b16 %v926, %v925
        %v932 = vsel %vm632, %v739, 0
        %934 = vmatprep.subr.bf16.mxu0 0
        %935 = vmatpush1.bf16.msra.mxu0 %v927
        %936 = vmatprep.subr.bf16.mxu0 0
        %937 = vmatpush1.bf16.msra.mxu0 %v928
        %938 = vmatprep.subr.bf16.mxu0 0
        %939 = vmatpush1.bf16.msra.mxu0 0
        %940 = vmatprep.subr.bf16.mxu0 0
        %941 = vmatpush1.bf16.msra.mxu0 0
        %942 = vmatprep.subr.bf16.mxu0 0
        %943 = vmatpush1.bf16.msra.mxu0 0
        %944 = vmatprep.subr.bf16.mxu0 0
        %945 = vmatpush1.bf16.msra.mxu0 0
        %946 = vmatprep.subr.bf16.mxu0 0
        %947 = vmatpush1.bf16.msra.mxu0 0
        %948 = vmatprep.subr.bf16.mxu0 0
        %949 = vmatpush1.bf16.msra.mxu0 0
        %950 = vmatprep.subr.bf16.mxu0 0
        %951 = vmatpush1.bf16.msra.mxu0 0
        %952 = vmatprep.subr.bf16.mxu0 0
        %953 = vmatpush1.bf16.msra.mxu0 0
        %954 = vmatprep.subr.bf16.mxu0 0
        %955 = vmatpush1.bf16.msra.mxu0 0
        %956 = vmatprep.subr.bf16.mxu0 0
        %957 = vmatpush1.bf16.msra.mxu0 0
        %958 = vmatprep.subr.bf16.mxu0 0
        %959 = vmatpush1.bf16.msra.mxu0 0
        %960 = vmatprep.subr.bf16.mxu0 0
        %961 = vmatpush1.bf16.msra.mxu0 0
        %962 = vmatprep.subr.bf16.mxu0 0
        %963 = vmatpush1.bf16.msra.mxu0 0
        %964 = vmatprep.subr.bf16.mxu0 0
        %965 = vmatpush1.bf16.msra.mxu0 0
        %966 = vmatprep.mubr.bf16.mxu0 0
        %967 = vmatmul.mubr.bf16.gmra.mrb[0].mxu0 %v932
        %v968 = vpop.f32.mrb[0].mxu0
        %v969 = vadd.f32 %v914, %v968
        %v970 = vpop.f32.mrb[0].mxu0
        %v971 = vpop.f32.mrb[0].mxu0
        %v972 = vpop.f32.mrb[0].mxu0
        %973 = vdwg.mxu0
        %974 = vrot.lane.b32.xlu0 %v629, 64
        %v975 = vpop.permute.xlu0 %974
        %976 = vrot.lane.b32.xlu0 %v630, 64
        %v977 = vpop.permute.xlu0 %976
        %v979 = vsel %vm632, %v975, 0
        %v982 = vsel %vm632, %v977, 0
        %984 = vmatprep.subr.bf16.mxu0 0
        %985 = vmatpush1.bf16.xpose.msra.mxu0 %v982
        %986 = vmatprep.subr.bf16.mxu0 0
        %987 = vmatpush1.bf16.xpose.msra.mxu0 0
        %988 = vmatprep.subr.bf16.mxu0 0
        %989 = vmatpush1.bf16.xpose.msra.mxu0 0
        %990 = vmatprep.subr.bf16.mxu0 0
        %991 = vmatpush1.bf16.xpose.msra.mxu0 0
        %992 = vmatprep.subr.bf16.mxu0 0
        %993 = vmatpush1.bf16.xpose.msra.mxu0 0
        %994 = vmatprep.subr.bf16.mxu0 0
        %995 = vmatpush1.bf16.xpose.msra.mxu0 0
        %996 = vmatprep.subr.bf16.mxu0 0
        %997 = vmatpush1.bf16.xpose.msra.mxu0 0
        %998 = vmatprep.subr.bf16.mxu0 0
        %999 = vmatpush1.bf16.xpose.msra.mxu0 0
        %1000 = vmatprep.subr.bf16.mxu0 0
        %1001 = vmatpush1.bf16.xpose.msra.mxu0 0
        %1002 = vmatprep.subr.bf16.mxu0 0
        %1003 = vmatpush1.bf16.xpose.msra.mxu0 0
        %1004 = vmatprep.subr.bf16.mxu0 0
        %1005 = vmatpush1.bf16.xpose.msra.mxu0 0
        %1006 = vmatprep.subr.bf16.mxu0 0
        %1007 = vmatpush1.bf16.xpose.msra.mxu0 0
        %1008 = vmatprep.subr.bf16.mxu0 0
        %1009 = vmatpush1.bf16.xpose.msra.mxu0 0
        %1010 = vmatprep.subr.bf16.mxu0 0
        %1011 = vmatpush1.bf16.xpose.msra.mxu0 0
        %1012 = vmatprep.subr.bf16.mxu0 0
        %1013 = vmatpush1.bf16.xpose.msra.mxu0 0
        %1014 = vmatprep.subr.bf16.mxu0 0
        %1015 = vmatpush1.bf16.xpose.msra.mxu0 0
        %1016 = vmatprep.mubr.bf16.mxu0 0
        %1017 = vmatmul.mubr.bf16.gmra.mrb[0].mxu0 %v979
        %v1018 = vpop.f32.mrb[0].mxu0
        %v1019 = vadd.f32 0.0, %v1018
        %v1020 = vpop.f32.mrb[0].mxu0
        %v1021 = vpop.f32.mrb[0].mxu0
        %v1022 = vpop.f32.mrb[0].mxu0
        %1023 = vdwg.mxu0
        %v1024 = vsel %vm679, %v1019, -inf
        %1025 = vmax.xlane.f32.xlu0 %v1024
        %v1026 = vpop.xlane.xlu0 %1025
        %v1027 = vsub.f32 %v1019, %v1026
        %v1028 = vmul.f32 %v1027, 1.442695
        %v1029 = vpow.pop %v1028
        %v1030 = vsel %vm679, %v1029, 0.0
        %1031 = vadd.xlane.f32.xlu0 %v1030
        %v1032 = vpop.xlane.xlu0 %1031
        %v1033 = vrcp.pop %v1032
        %v1034 = vmul.f32 %v1029, %v1033
        %v1035 = vadd.f32 %v807, %v1034
        %v1036 = vpack.c.bf16 %v1034, %v1034
        %1037 = vrot.lane.b32.xlu0 %v631, 64
        %v1038 = vpop.permute.xlu0 %1037
        %v1040 = vsel %vm679, %v1036, 0
        %v1043 = vsel %vm538, %v1038, 0
        %1045 = vmatprep.subr.bf16.mxu0 0
        %1046 = vmatpush1.bf16.msra.mxu0 %v1043
        %1047 = vmatprep.subr.bf16.mxu0 0
        %1048 = vmatpush1.bf16.msra.mxu0 0
        %1049 = vmatprep.subr.bf16.mxu0 0
        %1050 = vmatpush1.bf16.msra.mxu0 0
        %1051 = vmatprep.subr.bf16.mxu0 0
        %1052 = vmatpush1.bf16.msra.mxu0 0
        %1053 = vmatprep.subr.bf16.mxu0 0
        %1054 = vmatpush1.bf16.msra.mxu0 0
        %1055 = vmatprep.subr.bf16.mxu0 0
        %1056 = vmatpush1.bf16.msra.mxu0 0
        %1057 = vmatprep.subr.bf16.mxu0 0
        %1058 = vmatpush1.bf16.msra.mxu0 0
        %1059 = vmatprep.subr.bf16.mxu0 0
        %1060 = vmatpush1.bf16.msra.mxu0 0
        %1061 = vmatprep.subr.bf16.mxu0 0
        %1062 = vmatpush1.bf16.msra.mxu0 0
        %1063 = vmatprep.subr.bf16.mxu0 0
        %1064 = vmatpush1.bf16.msra.mxu0 0
        %1065 = vmatprep.subr.bf16.mxu0 0
        %1066 = vmatpush1.bf16.msra.mxu0 0
        %1067 = vmatprep.subr.bf16.mxu0 0
        %1068 = vmatpush1.bf16.msra.mxu0 0
        %1069 = vmatprep.subr.bf16.mxu0 0
        %1070 = vmatpush1.bf16.msra.mxu0 0
        %1071 = vmatprep.subr.bf16.mxu0 0
        %1072 = vmatpush1.bf16.msra.mxu0 0
        %1073 = vmatprep.subr.bf16.mxu0 0
        %1074 = vmatpush1.bf16.msra.mxu0 0
        %1075 = vmatprep.subr.bf16.mxu0 0
        %1076 = vmatpush1.bf16.msra.mxu0 0
        %1077 = vmatprep.mubr.bf16.mxu0 0
        %1078 = vmatmul.mubr.bf16.gmra.mrb[0].mxu0 %v1040
        %v1079 = vpop.f32.mrb[0].mxu0
        %v1080 = vadd.f32 0.0, %v1079
        %v1081 = vpop.f32.mrb[0].mxu0
        %v1082 = vpop.f32.mrb[0].mxu0
        %v1083 = vpop.f32.mrb[0].mxu0
        %1084 = vdwg.mxu0
        %v1085 = vpack.c.bf16 %v1080, %v1080
        %s1086 = scalar_lea.vmem %s3, 32
        %v1087 = vld [vmem:[%s1086] sm:$0xf]
        %v1088 = vld [vmem:[%s1086 + $0x4] sm:$0xf]
        %v1089 = vld [vmem:[%s1086 + $0x8] sm:$0xf]
        %v1090 = vld [vmem:[%s1086 + $0xc] sm:$0xf]
        %v1095 = vunpack.c.l.b16 %v1087
        %v1096 = vunpack.c.l.b16 %v1088
        %v1097 = vunpack.c.l.b16 %v1089
        %v1098 = vunpack.c.l.b16 %v1090
        %v1099 = vpack.c.b16 %v1096, %v1095
        %v1100 = vpack.c.b16 %v1098, %v1097
        %v1104 = vsel %vm632, %v1085, 0
        %1106 = vmatprep.subr.bf16.mxu0 0
        %1107 = vmatpush1.bf16.msra.mxu0 %v1099
        %1108 = vmatprep.subr.bf16.mxu0 0
        %1109 = vmatpush1.bf16.msra.mxu0 %v1100
        %1110 = vmatprep.subr.bf16.mxu0 0
        %1111 = vmatpush1.bf16.msra.mxu0 0
        %1112 = vmatprep.subr.bf16.mxu0 0
        %1113 = vmatpush1.bf16.msra.mxu0 0
        %1114 = vmatprep.subr.bf16.mxu0 0
        %1115 = vmatpush1.bf16.msra.mxu0 0
        %1116 = vmatprep.subr.bf16.mxu0 0
        %1117 = vmatpush1.bf16.msra.mxu0 0
        %1118 = vmatprep.subr.bf16.mxu0 0
        %1119 = vmatpush1.bf16.msra.mxu0 0
        %1120 = vmatprep.subr.bf16.mxu0 0
        %1121 = vmatpush1.bf16.msra.mxu0 0
        %1122 = vmatprep.subr.bf16.mxu0 0
        %1123 = vmatpush1.bf16.msra.mxu0 0
        %1124 = vmatprep.subr.bf16.mxu0 0
        %1125 = vmatpush1.bf16.msra.mxu0 0
        %1126 = vmatprep.subr.bf16.mxu0 0
        %1127 = vmatpush1.bf16.msra.mxu0 0
        %1128 = vmatprep.subr.bf16.mxu0 0
        %1129 = vmatpush1.bf16.msra.mxu0 0
        %1130 = vmatprep.subr.bf16.mxu0 0
        %1131 = vmatpush1.bf16.msra.mxu0 0
        %1132 = vmatprep.subr.bf16.mxu0 0
        %1133 = vmatpush1.bf16.msra.mxu0 0
        %1134 = vmatprep.subr.bf16.mxu0 0
        %1135 = vmatpush1.bf16.msra.mxu0 0
        %1136 = vmatprep.subr.bf16.mxu0 0
        %1137 = vmatpush1.bf16.msra.mxu0 0
        %1138 = vmatprep.mubr.bf16.mxu0 0
        %1139 = vmatmul.mubr.bf16.gmra.mrb[0].mxu0 %v1104
        %v1140 = vpop.f32.mrb[0].mxu0
        %v1141 = vadd.f32 0.0, %v1140
        %v1142 = vpop.f32.mrb[0].mxu0
        %v1143 = vpop.f32.mrb[0].mxu0
        %v1144 = vpop.f32.mrb[0].mxu0
        %1145 = vdwg.mxu0
        %v1146 = vadd.f32 %v969, %v1141
        %1147 = vrot.lane.b32.xlu0 %v629, 32
        %v1148 = vpop.permute.xlu0 %1147
        %1149 = vrot.lane.b32.xlu0 %v630, 32
        %v1150 = vpop.permute.xlu0 %1149
        %v1152 = vsel %vm632, %v1148, 0
        %v1155 = vsel %vm632, %v1150, 0
        %1157 = vmatprep.subr.bf16.mxu0 0
        %1158 = vmatpush1.bf16.xpose.msra.mxu0 %v1155
        %1159 = vmatprep.subr.bf16.mxu0 0
        %1160 = vmatpush1.bf16.xpose.msra.mxu0 0
        %1161 = vmatprep.subr.bf16.mxu0 0
        %1162 = vmatpush1.bf16.xpose.msra.mxu0 0
        %1163 = vmatprep.subr.bf16.mxu0 0
        %1164 = vmatpush1.bf16.xpose.msra.mxu0 0
        %1165 = vmatprep.subr.bf16.mxu0 0
        %1166 = vmatpush1.bf16.xpose.msra.mxu0 0
        %1167 = vmatprep.subr.bf16.mxu0 0
        %1168 = vmatpush1.bf16.xpose.msra.mxu0 0
        %1169 = vmatprep.subr.bf16.mxu0 0
        %1170 = vmatpush1.bf16.xpose.msra.mxu0 0
        %1171 = vmatprep.subr.bf16.mxu0 0
        %1172 = vmatpush1.bf16.xpose.msra.mxu0 0
        %1173 = vmatprep.subr.bf16.mxu0 0
        %1174 = vmatpush1.bf16.xpose.msra.mxu0 0
        %1175 = vmatprep.subr.bf16.mxu0 0
        %1176 = vmatpush1.bf16.xpose.msra.mxu0 0
        %1177 = vmatprep.subr.bf16.mxu0 0
        %1178 = vmatpush1.bf16.xpose.msra.mxu0 0
        %1179 = vmatprep.subr.bf16.mxu0 0
        %1180 = vmatpush1.bf16.xpose.msra.mxu0 0
        %1181 = vmatprep.subr.bf16.mxu0 0
        %1182 = vmatpush1.bf16.xpose.msra.mxu0 0
        %1183 = vmatprep.subr.bf16.mxu0 0
        %1184 = vmatpush1.bf16.xpose.msra.mxu0 0
        %1185 = vmatprep.subr.bf16.mxu0 0
        %1186 = vmatpush1.bf16.xpose.msra.mxu0 0
        %1187 = vmatprep.subr.bf16.mxu0 0
        %1188 = vmatpush1.bf16.xpose.msra.mxu0 0
        %1189 = vmatprep.mubr.bf16.mxu0 0
        %1190 = vmatmul.mubr.bf16.gmra.mrb[0].mxu0 %v1152
        %v1191 = vpop.f32.mrb[0].mxu0
        %v1192 = vadd.f32 0.0, %v1191
        %v1193 = vpop.f32.mrb[0].mxu0
        %v1194 = vpop.f32.mrb[0].mxu0
        %v1195 = vpop.f32.mrb[0].mxu0
        %1196 = vdwg.mxu0
        %v1197 = vsel %vm679, %v1192, -inf
        %1198 = vmax.xlane.f32.xlu0 %v1197
        %v1199 = vpop.xlane.xlu0 %1198
        %v1200 = vsub.f32 %v1192, %v1199
        %v1201 = vmul.f32 %v1200, 1.442695
        %v1202 = vpow.pop %v1201
        %v1203 = vsel %vm679, %v1202, 0.0
        %1204 = vadd.xlane.f32.xlu0 %v1203
        %v1205 = vpop.xlane.xlu0 %1204
        %v1206 = vrcp.pop %v1205
        %v1207 = vmul.f32 %v1202, %v1206
        %v1208 = vadd.f32 %v1035, %v1207
        %v1209 = vpack.c.bf16 %v1207, %v1207
        %1210 = vrot.lane.b32.xlu0 %v631, 32
        %v1211 = vpop.permute.xlu0 %1210
        %v1213 = vsel %vm679, %v1209, 0
        %v1216 = vsel %vm538, %v1211, 0
        %1218 = vmatprep.subr.bf16.mxu0 0
        %1219 = vmatpush1.bf16.msra.mxu0 %v1216
        %1220 = vmatprep.subr.bf16.mxu0 0
        %1221 = vmatpush1.bf16.msra.mxu0 0
        %1222 = vmatprep.subr.bf16.mxu0 0
        %1223 = vmatpush1.bf16.msra.mxu0 0
        %1224 = vmatprep.subr.bf16.mxu0 0
        %1225 = vmatpush1.bf16.msra.mxu0 0
        %1226 = vmatprep.subr.bf16.mxu0 0
        %1227 = vmatpush1.bf16.msra.mxu0 0
        %1228 = vmatprep.subr.bf16.mxu0 0
        %1229 = vmatpush1.bf16.msra.mxu0 0
        %1230 = vmatprep.subr.bf16.mxu0 0
        %1231 = vmatpush1.bf16.msra.mxu0 0
        %1232 = vmatprep.subr.bf16.mxu0 0
        %1233 = vmatpush1.bf16.msra.mxu0 0
        %1234 = vmatprep.subr.bf16.mxu0 0
        %1235 = vmatpush1.bf16.msra.mxu0 0
        %1236 = vmatprep.subr.bf16.mxu0 0
        %1237 = vmatpush1.bf16.msra.mxu0 0
        %1238 = vmatprep.subr.bf16.mxu0 0
        %1239 = vmatpush1.bf16.msra.mxu0 0
        %1240 = vmatprep.subr.bf16.mxu0 0
        %1241 = vmatpush1.bf16.msra.mxu0 0
        %1242 = vmatprep.subr.bf16.mxu0 0
        %1243 = vmatpush1.bf16.msra.mxu0 0
        %1244 = vmatprep.subr.bf16.mxu0 0
        %1245 = vmatpush1.bf16.msra.mxu0 0
        %1246 = vmatprep.subr.bf16.mxu0 0
        %1247 = vmatpush1.bf16.msra.mxu0 0
        %1248 = vmatprep.subr.bf16.mxu0 0
        %1249 = vmatpush1.bf16.msra.mxu0 0
        %1250 = vmatprep.mubr.bf16.mxu0 0
        %1251 = vmatmul.mubr.bf16.gmra.mrb[0].mxu0 %v1213
        %v1252 = vpop.f32.mrb[0].mxu0
        %v1253 = vadd.f32 0.0, %v1252
        %v1254 = vpop.f32.mrb[0].mxu0
        %v1255 = vpop.f32.mrb[0].mxu0
        %v1256 = vpop.f32.mrb[0].mxu0
        %1257 = vdwg.mxu0
        %v1258 = vpack.c.bf16 %v1253, %v1253
        %s1259 = scalar_lea.vmem %s3, 48
        %v1260 = vld [vmem:[%s1259] sm:$0xf]
        %v1261 = vld [vmem:[%s1259 + $0x4] sm:$0xf]
        %v1262 = vld [vmem:[%s1259 + $0x8] sm:$0xf]
        %v1263 = vld [vmem:[%s1259 + $0xc] sm:$0xf]
        %v1268 = vunpack.c.l.b16 %v1260
        %v1269 = vunpack.c.l.b16 %v1261
        %v1270 = vunpack.c.l.b16 %v1262
        %v1271 = vunpack.c.l.b16 %v1263
        %v1272 = vpack.c.b16 %v1269, %v1268
        %v1273 = vpack.c.b16 %v1271, %v1270
        %v1277 = vsel %vm632, %v1258, 0
        %1279 = vmatprep.subr.bf16.mxu0 0
        %1280 = vmatpush1.bf16.msra.mxu0 %v1272
        %1281 = vmatprep.subr.bf16.mxu0 0
        %1282 = vmatpush1.bf16.msra.mxu0 %v1273
        %1283 = vmatprep.subr.bf16.mxu0 0
        %1284 = vmatpush1.bf16.msra.mxu0 0
        %1285 = vmatprep.subr.bf16.mxu0 0
        %1286 = vmatpush1.bf16.msra.mxu0 0
        %1287 = vmatprep.subr.bf16.mxu0 0
        %1288 = vmatpush1.bf16.msra.mxu0 0
        %1289 = vmatprep.subr.bf16.mxu0 0
        %1290 = vmatpush1.bf16.msra.mxu0 0
        %1291 = vmatprep.subr.bf16.mxu0 0
        %1292 = vmatpush1.bf16.msra.mxu0 0
        %1293 = vmatprep.subr.bf16.mxu0 0
        %1294 = vmatpush1.bf16.msra.mxu0 0
        %1295 = vmatprep.subr.bf16.mxu0 0
        %1296 = vmatpush1.bf16.msra.mxu0 0
        %1297 = vmatprep.subr.bf16.mxu0 0
        %1298 = vmatpush1.bf16.msra.mxu0 0
        %1299 = vmatprep.subr.bf16.mxu0 0
        %1300 = vmatpush1.bf16.msra.mxu0 0
        %1301 = vmatprep.subr.bf16.mxu0 0
        %1302 = vmatpush1.bf16.msra.mxu0 0
        %1303 = vmatprep.subr.bf16.mxu0 0
        %1304 = vmatpush1.bf16.msra.mxu0 0
        %1305 = vmatprep.subr.bf16.mxu0 0
        %1306 = vmatpush1.bf16.msra.mxu0 0
        %1307 = vmatprep.subr.bf16.mxu0 0
        %1308 = vmatpush1.bf16.msra.mxu0 0
        %1309 = vmatprep.subr.bf16.mxu0 0
        %1310 = vmatpush1.bf16.msra.mxu0 0
        %1311 = vmatprep.mubr.bf16.mxu0 0
        %1312 = vmatmul.mubr.bf16.gmra.mrb[0].mxu0 %v1277
        %v1313 = vpop.f32.mrb[0].mxu0
        %v1314 = vadd.f32 0.0, %v1313
        %v1315 = vpop.f32.mrb[0].mxu0
        %v1316 = vpop.f32.mrb[0].mxu0
        %v1317 = vpop.f32.mrb[0].mxu0
        %1318 = vdwg.mxu0
        %v1319 = vadd.f32 %v1146, %v1314
        %v1320 = vmul.f32 %v1208, 0.25
        %vm1321 = vcmask 57344
        %1322 = vst.msk [vmem:[%s357] sm:$0x1] %vm1321, %v1320
        %v1323 = vadd.f32 %v359, %v1319
        %v1324 = vlaneseq
        %v1325 = vshrl.u32 %v1324, 7
        %v1326 = vsub.s32 0, %v1325
        %v1327 = vrot.slane %v360, %v1326
        %v1328 = vadd.f32 %v1323, %v1327
        %v1329 = vsel %vm534, %v1328, 0.0
        %1330 = vadd.xlane.f32.xlu0 %v1329
        %v1331 = vpop.xlane.xlu0 %1330
        %v1332 = vrcp.pop 120.0
        %v1333 = vmul.f32 %v1331, %v1332
        %v1334 = vsub.f32 %v1328, %v1333
        %v1335 = vmul.f32 %v1334, %v1334
        %v1336 = vsel %vm534, %v1335, 0.0
        %1337 = vadd.xlane.f32.xlu0 %v1336
        %v1338 = vpop.xlane.xlu0 %1337
        %v1339 = vmul.f32 %v1338, %v1332
        %v1340 = vadd.f32 %v1339, 1e-05
        %v1341 = vrsqrt.pop %v1340
        %v1342 = vmul.f32 %v1334, %v1341
        %v1343 = vlaneseq
        %v1344 = vshrl.u32 %v1343, 7
        %v1345 = vsub.s32 0, %v1344
        %v1346 = vrot.slane %v362, %v1345
        %v1347 = vmul.f32 %v1342, %v1346
        %v1348 = vlaneseq
        %v1349 = vshrl.u32 %v1348, 7
        %v1350 = vsub.s32 0, %v1349
        %v1351 = vrot.slane %v363, %v1350
        %v1352 = vadd.f32 %v1347, %v1351
        %v1353 = vpack.c.bf16 %v1352, %v1352
        %v1354 = vld [vmem:[%s4] sm:$0xff]
        %v1355 = vld [vmem:[%s4 + $0x8] sm:$0xff]
        %v1356 = vld [vmem:[%s4 + $0x10] sm:$0xff]
        %v1357 = vld [vmem:[%s4 + $0x18] sm:$0xff]
        %v1358 = vld [vmem:[%s4 + $0x20] sm:$0xff]
        %v1359 = vld [vmem:[%s4 + $0x28] sm:$0xff]
        %v1360 = vld [vmem:[%s4 + $0x30] sm:$0xff]
        %v1361 = vld [vmem:[%s4 + $0x38] sm:$0xff]
        %v1362 = vld [vmem:[%s4 + $0x40] sm:$0xff]
        %v1363 = vld [vmem:[%s4 + $0x48] sm:$0xff]
        %v1364 = vld [vmem:[%s4 + $0x50] sm:$0xff]
        %v1365 = vld [vmem:[%s4 + $0x58] sm:$0xff]
        %v1366 = vld [vmem:[%s4 + $0x60] sm:$0xff]
        %v1367 = vld [vmem:[%s4 + $0x68] sm:$0xff]
        %v1368 = vld [vmem:[%s4 + $0x70] sm:$0xff]
        %v1369 = vld [vmem:[%s4 + $0x78] sm:$0xff]
        %v1370 = vld [vmem:[%s4 + $0x80] sm:$0xff]
        %v1371 = vld [vmem:[%s4 + $0x88] sm:$0xff]
        %v1372 = vld [vmem:[%s4 + $0x90] sm:$0xff]
        %v1373 = vld [vmem:[%s4 + $0x98] sm:$0xff]
        %v1374 = vld [vmem:[%s4 + $0xa0] sm:$0xff]
        %v1375 = vld [vmem:[%s4 + $0xa8] sm:$0xff]
        %v1376 = vld [vmem:[%s4 + $0xb0] sm:$0xff]
        %v1377 = vld [vmem:[%s4 + $0xb8] sm:$0xff]
        %v1378 = vld [vmem:[%s4 + $0xc0] sm:$0xff]
        %v1379 = vld [vmem:[%s4 + $0xc8] sm:$0xff]
        %v1380 = vld [vmem:[%s4 + $0xd0] sm:$0xff]
        %v1381 = vld [vmem:[%s4 + $0xd8] sm:$0xff]
        %v1382 = vld [vmem:[%s4 + $0xe0] sm:$0xff]
        %v1383 = vld [vmem:[%s4 + $0xe8] sm:$0xff]
        %v1384 = vld [vmem:[%s5] sm:$0xf]
        %v1386 = vlaneseq
        %v1387 = vshrl.u32 %v1386, 7
        %v1388 = vsub.s32 0, %v1387
        %v1389 = vrot.slane %v1384, %v1388
        %v1390 = vlaneseq
        %v1391 = vshrl.u32 %v1390, 7
        %v1392 = vsub.s32 1, %v1391
        %v1393 = vrot.slane %v1384, %v1392
        %v1394 = vlaneseq
        %v1395 = vshrl.u32 %v1394, 7
        %v1396 = vsub.s32 2, %v1395
        %v1397 = vrot.slane %v1384, %v1396
        %v1398 = vlaneseq
        %v1399 = vshrl.u32 %v1398, 7
        %v1400 = vsub.s32 3, %v1399
        %v1401 = vrot.slane %v1384, %v1400
        %v1436 = vunpack.c.l.b16 %v1354
        %v1437 = vunpack.c.h.b16 %v1354
        %v1438 = vunpack.c.l.b16 %v1355
        %v1439 = vunpack.c.h.b16 %v1355
        %v1440 = vunpack.c.l.b16 %v1356
        %v1441 = vunpack.c.h.b16 %v1356
        %v1442 = vunpack.c.l.b16 %v1357
        %v1443 = vunpack.c.h.b16 %v1357
        %v1444 = vunpack.c.l.b16 %v1358
        %v1445 = vunpack.c.h.b16 %v1358
        %v1446 = vunpack.c.l.b16 %v1359
        %v1447 = vunpack.c.h.b16 %v1359
        %v1448 = vunpack.c.l.b16 %v1360
        %v1449 = vunpack.c.h.b16 %v1360
        %v1450 = vunpack.c.l.b16 %v1361
        %v1451 = vunpack.c.h.b16 %v1361
        %v1452 = vunpack.c.l.b16 %v1362
        %v1453 = vunpack.c.h.b16 %v1362
        %v1454 = vunpack.c.l.b16 %v1363
        %v1455 = vunpack.c.h.b16 %v1363
        %v1456 = vunpack.c.l.b16 %v1364
        %v1457 = vunpack.c.h.b16 %v1364
        %v1458 = vunpack.c.l.b16 %v1365
        %v1459 = vunpack.c.h.b16 %v1365
        %v1460 = vunpack.c.l.b16 %v1366
        %v1461 = vunpack.c.h.b16 %v1366
        %v1462 = vunpack.c.l.b16 %v1367
        %v1463 = vunpack.c.h.b16 %v1367
        %v1464 = vunpack.c.l.b16 %v1368
        %v1465 = vunpack.c.h.b16 %v1368
        %v1466 = vunpack.c.l.b16 %v1369
        %v1467 = vunpack.c.h.b16 %v1369
        %v1468 = vunpack.c.l.b16 %v1370
        %v1469 = vunpack.c.h.b16 %v1370
        %v1470 = vunpack.c.l.b16 %v1371
        %v1471 = vunpack.c.h.b16 %v1371
        %v1472 = vunpack.c.l.b16 %v1372
        %v1473 = vunpack.c.h.b16 %v1372
        %v1474 = vunpack.c.l.b16 %v1373
        %v1475 = vunpack.c.h.b16 %v1373
        %v1476 = vunpack.c.l.b16 %v1374
        %v1477 = vunpack.c.h.b16 %v1374
        %v1478 = vunpack.c.l.b16 %v1375
        %v1479 = vunpack.c.h.b16 %v1375
        %v1480 = vunpack.c.l.b16 %v1376
        %v1481 = vunpack.c.h.b16 %v1376
        %v1482 = vunpack.c.l.b16 %v1377
        %v1483 = vunpack.c.h.b16 %v1377
        %v1484 = vunpack.c.l.b16 %v1378
        %v1485 = vunpack.c.h.b16 %v1378
        %v1486 = vunpack.c.l.b16 %v1379
        %v1487 = vunpack.c.h.b16 %v1379
        %v1488 = vunpack.c.l.b16 %v1380
        %v1489 = vunpack.c.h.b16 %v1380
        %v1490 = vunpack.c.l.b16 %v1381
        %v1491 = vunpack.c.h.b16 %v1381
        %v1492 = vunpack.c.l.b16 %v1382
        %v1493 = vunpack.c.h.b16 %v1382
        %v1494 = vunpack.c.l.b16 %v1383
        %v1495 = vunpack.c.h.b16 %v1383
        %v1496 = vpack.c.b16 %v1440, %v1436
        %v1497 = vpack.c.b16 %v1441, %v1437
        %v1498 = vpack.c.b16 %v1442, %v1438
        %v1499 = vpack.c.b16 %v1443, %v1439
        %v1500 = vpack.c.b16 %v1448, %v1444
        %v1501 = vpack.c.b16 %v1449, %v1445
        %v1502 = vpack.c.b16 %v1450, %v1446
        %v1503 = vpack.c.b16 %v1451, %v1447
        %v1504 = vpack.c.b16 %v1456, %v1452
        %v1505 = vpack.c.b16 %v1457, %v1453
        %v1506 = vpack.c.b16 %v1458, %v1454
        %v1507 = vpack.c.b16 %v1459, %v1455
        %v1508 = vpack.c.b16 %v1464, %v1460
        %v1509 = vpack.c.b16 %v1465, %v1461
        %v1510 = vpack.c.b16 %v1466, %v1462
        %v1511 = vpack.c.b16 %v1467, %v1463
        %v1512 = vpack.c.b16 %v1472, %v1468
        %v1513 = vpack.c.b16 %v1473, %v1469
        %v1514 = vpack.c.b16 %v1474, %v1470
        %v1515 = vpack.c.b16 %v1475, %v1471
        %v1516 = vpack.c.b16 %v1480, %v1476
        %v1517 = vpack.c.b16 %v1481, %v1477
        %v1518 = vpack.c.b16 %v1482, %v1478
        %v1519 = vpack.c.b16 %v1483, %v1479
        %v1520 = vpack.c.b16 %v1488, %v1484
        %v1521 = vpack.c.b16 %v1489, %v1485
        %v1522 = vpack.c.b16 %v1490, %v1486
        %v1523 = vpack.c.b16 %v1491, %v1487
        %v1524 = vpack.c.b16 %v1492, %v1492
        %v1525 = vpack.c.b16 %v1493, %v1493
        %v1526 = vpack.c.b16 %v1494, %v1494
        %v1527 = vpack.c.b16 %v1495, %v1495
        %v1557 = vsel %vm534, %v1353, 0
        %v1560 = vsel %vm538, %v1524, 0
        %v1563 = vsel %vm538, %v1525, 0
        %v1566 = vsel %vm538, %v1526, 0
        %v1569 = vsel %vm538, %v1527, 0
        %1571 = vmatprep.subr.bf16.mxu0 %v1497
        %1572 = vmatpush1.bf16.msra.mxu0 %v1496
        %1573 = vmatprep.subr.bf16.mxu0 %v1501
        %1574 = vmatpush1.bf16.msra.mxu0 %v1500
        %1575 = vmatprep.subr.bf16.mxu0 %v1505
        %1576 = vmatpush1.bf16.msra.mxu0 %v1504
        %1577 = vmatprep.subr.bf16.mxu0 %v1509
        %1578 = vmatpush1.bf16.msra.mxu0 %v1508
        %1579 = vmatprep.subr.bf16.mxu0 %v1513
        %1580 = vmatpush1.bf16.msra.mxu0 %v1512
        %1581 = vmatprep.subr.bf16.mxu0 %v1517
        %1582 = vmatpush1.bf16.msra.mxu0 %v1516
        %1583 = vmatprep.subr.bf16.mxu0 %v1521
        %1584 = vmatpush1.bf16.msra.mxu0 %v1520
        %1585 = vmatprep.subr.bf16.mxu0 %v1563
        %1586 = vmatpush1.bf16.msra.mxu0 %v1560
        %1587 = vmatprep.subr.bf16.mxu0 0
        %1588 = vmatpush1.bf16.msra.mxu0 0
        %1589 = vmatprep.subr.bf16.mxu0 0
        %1590 = vmatpush1.bf16.msra.mxu0 0
        %1591 = vmatprep.subr.bf16.mxu0 0
        %1592 = vmatpush1.bf16.msra.mxu0 0
        %1593 = vmatprep.subr.bf16.mxu0 0
        %1594 = vmatpush1.bf16.msra.mxu0 0
        %1595 = vmatprep.subr.bf16.mxu0 0
        %1596 = vmatpush1.bf16.msra.mxu0 0
        %1597 = vmatprep.subr.bf16.mxu0 0
        %1598 = vmatpush1.bf16.msra.mxu0 0
        %1599 = vmatprep.subr.bf16.mxu0 0
        %1600 = vmatpush1.bf16.msra.mxu0 0
        %1601 = vmatprep.subr.bf16.mxu0 0
        %1602 = vmatpush1.bf16.msra.mxu0 0
        %1603 = vmatprep.mubr.bf16.mxu0 0
        %1604 = vmatmul.mubr.bf16.gmra.mrb[0].mxu0 %v1557
        %v1605 = vpop.f32.mrb[0].mxu0
        %v1606 = vadd.f32 %v1389, %v1605
        %v1607 = vpop.f32.mrb[0].mxu0
        %v1608 = vadd.f32 %v1393, %v1607
        %v1609 = vpop.f32.mrb[0].mxu0
        %v1610 = vpop.f32.mrb[0].mxu0
        %1611 = vdwg.mxu0
        %1612 = vmatprep.subr.bf16.mxu0 %v1499
        %1613 = vmatpush1.bf16.msra.mxu0 %v1498
        %1614 = vmatprep.subr.bf16.mxu0 %v1503
        %1615 = vmatpush1.bf16.msra.mxu0 %v1502
        %1616 = vmatprep.subr.bf16.mxu0 %v1507
        %1617 = vmatpush1.bf16.msra.mxu0 %v1506
        %1618 = vmatprep.subr.bf16.mxu0 %v1511
        %1619 = vmatpush1.bf16.msra.mxu0 %v1510
        %1620 = vmatprep.subr.bf16.mxu0 %v1515
        %1621 = vmatpush1.bf16.msra.mxu0 %v1514
        %1622 = vmatprep.subr.bf16.mxu0 %v1519
        %1623 = vmatpush1.bf16.msra.mxu0 %v1518
        %1624 = vmatprep.subr.bf16.mxu0 %v1523
        %1625 = vmatpush1.bf16.msra.mxu0 %v1522
        %1626 = vmatprep.subr.bf16.mxu0 %v1569
        %1627 = vmatpush1.bf16.msra.mxu0 %v1566
        %1628 = vmatprep.subr.bf16.mxu0 0
        %1629 = vmatpush1.bf16.msra.mxu0 0
        %1630 = vmatprep.subr.bf16.mxu0 0
        %1631 = vmatpush1.bf16.msra.mxu0 0
        %1632 = vmatprep.subr.bf16.mxu0 0
        %1633 = vmatpush1.bf16.msra.mxu0 0
        %1634 = vmatprep.subr.bf16.mxu0 0
        %1635 = vmatpush1.bf16.msra.mxu0 0
        %1636 = vmatprep.subr.bf16.mxu0 0
        %1637 = vmatpush1.bf16.msra.mxu0 0
        %1638 = vmatprep.subr.bf16.mxu0 0
        %1639 = vmatpush1.bf16.msra.mxu0 0
        %1640 = vmatprep.subr.bf16.mxu0 0
        %1641 = vmatpush1.bf16.msra.mxu0 0
        %1642 = vmatprep.subr.bf16.mxu0 0
        %1643 = vmatpush1.bf16.msra.mxu0 0
        %1644 = vmatprep.mubr.bf16.mxu0 0
        %1645 = vmatmul.mubr.bf16.gmra.mrb[0].mxu0 %v1557
        %v1646 = vpop.f32.mrb[0].mxu0
        %v1647 = vadd.f32 %v1397, %v1646
        %v1648 = vpop.f32.mrb[0].mxu0
        %v1649 = vadd.f32 %v1401, %v1648
        %v1650 = vpop.f32.mrb[0].mxu0
        %v1651 = vpop.f32.mrb[0].mxu0
        %1652 = vdwg.mxu0
        %v1653 = vmax.f32 %v1606, 0.0
        %v1654 = vmax.f32 %v1608, 0.0
        %v1655 = vmax.f32 %v1647, 0.0
        %v1656 = vmax.f32 %v1649, 0.0
        %v1657 = vpack.c.bf16 %v1653, %v1653
        %v1658 = vpack.c.bf16 %v1654, %v1654
        %v1659 = vpack.c.bf16 %v1655, %v1655
        %v1660 = vpack.c.bf16 %v1656, %v1656
        %v1661 = vld [vmem:[%s6] sm:$0xf]
        %v1662 = vld [vmem:[%s6 + $0x4] sm:$0xf]
        %v1663 = vld [vmem:[%s6 + $0x8] sm:$0xf]
        %v1664 = vld [vmem:[%s6 + $0xc] sm:$0xf]
        %v1665 = vld [vmem:[%s6 + $0x10] sm:$0xf]
        %v1666 = vld [vmem:[%s6 + $0x14] sm:$0xf]
        %v1667 = vld [vmem:[%s6 + $0x18] sm:$0xf]
        %v1668 = vld [vmem:[%s6 + $0x1c] sm:$0xf]
        %v1669 = vld [vmem:[%s6 + $0x20] sm:$0xf]
        %v1670 = vld [vmem:[%s6 + $0x24] sm:$0xf]
        %v1671 = vld [vmem:[%s6 + $0x28] sm:$0xf]
        %v1672 = vld [vmem:[%s6 + $0x2c] sm:$0xf]
        %v1673 = vld [vmem:[%s6 + $0x30] sm:$0xf]
        %v1674 = vld [vmem:[%s6 + $0x34] sm:$0xf]
        %v1675 = vld [vmem:[%s6 + $0x38] sm:$0xf]
        %v1676 = vld [vmem:[%s6 + $0x3c] sm:$0xf]
        %v1677 = vld [vmem:[%s6 + $0x40] sm:$0xf]
        %v1678 = vld [vmem:[%s6 + $0x44] sm:$0xf]
        %v1679 = vld [vmem:[%s6 + $0x48] sm:$0xf]
        %v1680 = vld [vmem:[%s6 + $0x4c] sm:$0xf]
        %v1681 = vld [vmem:[%s6 + $0x50] sm:$0xf]
        %v1682 = vld [vmem:[%s6 + $0x54] sm:$0xf]
        %v1683 = vld [vmem:[%s6 + $0x58] sm:$0xf]
        %v1684 = vld [vmem:[%s6 + $0x5c] sm:$0xf]
        %v1685 = vld [vmem:[%s6 + $0x60] sm:$0xf]
        %v1686 = vld [vmem:[%s6 + $0x64] sm:$0xf]
        %v1687 = vld [vmem:[%s6 + $0x68] sm:$0xf]
        %v1688 = vld [vmem:[%s6 + $0x6c] sm:$0xf]
        %v1689 = vld [vmem:[%s6 + $0x70] sm:$0xf]
        %v1690 = vld [vmem:[%s6 + $0x74] sm:$0xf]
        %v1691 = vld [vmem:[%s6 + $0x78] sm:$0xf]
        %v1692 = vld [vmem:[%s6 + $0x7c] sm:$0xf]
        %v1693 = vld [vmem:[%s6 + $0x80] sm:$0xf]
        %v1694 = vld [vmem:[%s6 + $0x84] sm:$0xf]
        %v1695 = vld [vmem:[%s6 + $0x88] sm:$0xf]
        %v1696 = vld [vmem:[%s6 + $0x8c] sm:$0xf]
        %v1697 = vld [vmem:[%s6 + $0x90] sm:$0xf]
        %v1698 = vld [vmem:[%s6 + $0x94] sm:$0xf]
        %v1699 = vld [vmem:[%s6 + $0x98] sm:$0xf]
        %v1700 = vld [vmem:[%s6 + $0x9c] sm:$0xf]
        %v1701 = vld [vmem:[%s6 + $0xa0] sm:$0xf]
        %v1702 = vld [vmem:[%s6 + $0xa4] sm:$0xf]
        %v1703 = vld [vmem:[%s6 + $0xa8] sm:$0xf]
        %v1704 = vld [vmem:[%s6 + $0xac] sm:$0xf]
        %v1705 = vld [vmem:[%s6 + $0xb0] sm:$0xf]
        %v1706 = vld [vmem:[%s6 + $0xb4] sm:$0xf]
        %v1707 = vld [vmem:[%s6 + $0xb8] sm:$0xf]
        %v1708 = vld [vmem:[%s6 + $0xbc] sm:$0xf]
        %v1709 = vld [vmem:[%s6 + $0xc0] sm:$0xf]
        %v1710 = vld [vmem:[%s6 + $0xc4] sm:$0xf]
        %v1711 = vld [vmem:[%s6 + $0xc8] sm:$0xf]
        %v1712 = vld [vmem:[%s6 + $0xcc] sm:$0xf]
        %v1713 = vld [vmem:[%s6 + $0xd0] sm:$0xf]
        %v1714 = vld [vmem:[%s6 + $0xd4] sm:$0xf]
        %v1715 = vld [vmem:[%s6 + $0xd8] sm:$0xf]
        %v1716 = vld [vmem:[%s6 + $0xdc] sm:$0xf]
        %v1717 = vld [vmem:[%s6 + $0xe0] sm:$0xf]
        %v1718 = vld [vmem:[%s6 + $0xe4] sm:$0xf]
        %v1719 = vld [vmem:[%s6 + $0xe8] sm:$0xf]
        %v1720 = vld [vmem:[%s6 + $0xec] sm:$0xf]
        %v1721 = vld [vmem:[%s6 + $0xf0] sm:$0xf]
        %v1722 = vld [vmem:[%s6 + $0xf4] sm:$0xf]
        %v1723 = vld [vmem:[%s6 + $0xf8] sm:$0xf]
        %v1724 = vld [vmem:[%s6 + $0xfc] sm:$0xf]
        %v1725 = vlaneseq
        %v1726 = vshrl.u32 %v1725, 7
        %v1727 = vsub.s32 0, %v1726
        %v1728 = vrot.slane %v361, %v1727
        %v1793 = vunpack.c.l.b16 %v1661
        %v1794 = vunpack.c.l.b16 %v1662
        %v1795 = vunpack.c.l.b16 %v1663
        %v1796 = vunpack.c.l.b16 %v1664
        %v1797 = vunpack.c.l.b16 %v1665
        %v1798 = vunpack.c.l.b16 %v1666
        %v1799 = vunpack.c.l.b16 %v1667
        %v1800 = vunpack.c.l.b16 %v1668
        %v1801 = vunpack.c.l.b16 %v1669
        %v1802 = vunpack.c.l.b16 %v1670
        %v1803 = vunpack.c.l.b16 %v1671
        %v1804 = vunpack.c.l.b16 %v1672
        %v1805 = vunpack.c.l.b16 %v1673
        %v1806 = vunpack.c.l.b16 %v1674
        %v1807 = vunpack.c.l.b16 %v1675
        %v1808 = vunpack.c.l.b16 %v1676
        %v1809 = vunpack.c.l.b16 %v1677
        %v1810 = vunpack.c.l.b16 %v1678
        %v1811 = vunpack.c.l.b16 %v1679
        %v1812 = vunpack.c.l.b16 %v1680
        %v1813 = vunpack.c.l.b16 %v1681
        %v1814 = vunpack.c.l.b16 %v1682
        %v1815 = vunpack.c.l.b16 %v1683
        %v1816 = vunpack.c.l.b16 %v1684
        %v1817 = vunpack.c.l.b16 %v1685
        %v1818 = vunpack.c.l.b16 %v1686
        %v1819 = vunpack.c.l.b16 %v1687
        %v1820 = vunpack.c.l.b16 %v1688
        %v1821 = vunpack.c.l.b16 %v1689
        %v1822 = vunpack.c.l.b16 %v1690
        %v1823 = vunpack.c.l.b16 %v1691
        %v1824 = vunpack.c.l.b16 %v1692
        %v1825 = vunpack.c.l.b16 %v1693
        %v1826 = vunpack.c.l.b16 %v1694
        %v1827 = vunpack.c.l.b16 %v1695
        %v1828 = vunpack.c.l.b16 %v1696
        %v1829 = vunpack.c.l.b16 %v1697
        %v1830 = vunpack.c.l.b16 %v1698
        %v1831 = vunpack.c.l.b16 %v1699
        %v1832 = vunpack.c.l.b16 %v1700
        %v1833 = vunpack.c.l.b16 %v1701
        %v1834 = vunpack.c.l.b16 %v1702
        %v1835 = vunpack.c.l.b16 %v1703
        %v1836 = vunpack.c.l.b16 %v1704
        %v1837 = vunpack.c.l.b16 %v1705
        %v1838 = vunpack.c.l.b16 %v1706
        %v1839 = vunpack.c.l.b16 %v1707
        %v1840 = vunpack.c.l.b16 %v1708
        %v1841 = vunpack.c.l.b16 %v1709
        %v1842 = vunpack.c.l.b16 %v1710
        %v1843 = vunpack.c.l.b16 %v1711
        %v1844 = vunpack.c.l.b16 %v1712
        %v1845 = vunpack.c.l.b16 %v1713
        %v1846 = vunpack.c.l.b16 %v1714
        %v1847 = vunpack.c.l.b16 %v1715
        %v1848 = vunpack.c.l.b16 %v1716
        %v1849 = vunpack.c.l.b16 %v1717
        %v1850 = vunpack.c.l.b16 %v1718
        %v1851 = vunpack.c.l.b16 %v1719
        %v1852 = vunpack.c.l.b16 %v1720
        %v1853 = vunpack.c.l.b16 %v1721
        %v1854 = vunpack.c.l.b16 %v1722
        %v1855 = vunpack.c.l.b16 %v1723
        %v1856 = vunpack.c.l.b16 %v1724
        %v1857 = vpack.c.b16 %v1794, %v1793
        %v1858 = vpack.c.b16 %v1796, %v1795
        %v1859 = vpack.c.b16 %v1798, %v1797
        %v1860 = vpack.c.b16 %v1800, %v1799
        %v1861 = vpack.c.b16 %v1802, %v1801
        %v1862 = vpack.c.b16 %v1804, %v1803
        %v1863 = vpack.c.b16 %v1806, %v1805
        %v1864 = vpack.c.b16 %v1808, %v1807
        %v1865 = vpack.c.b16 %v1810, %v1809
        %v1866 = vpack.c.b16 %v1812, %v1811
        %v1867 = vpack.c.b16 %v1814, %v1813
        %v1868 = vpack.c.b16 %v1816, %v1815
        %v1869 = vpack.c.b16 %v1818, %v1817
        %v1870 = vpack.c.b16 %v1820, %v1819
        %v1871 = vpack.c.b16 %v1822, %v1821
        %v1872 = vpack.c.b16 %v1824, %v1823
        %v1873 = vpack.c.b16 %v1826, %v1825
        %v1874 = vpack.c.b16 %v1828, %v1827
        %v1875 = vpack.c.b16 %v1830, %v1829
        %v1876 = vpack.c.b16 %v1832, %v1831
        %v1877 = vpack.c.b16 %v1834, %v1833
        %v1878 = vpack.c.b16 %v1836, %v1835
        %v1879 = vpack.c.b16 %v1838, %v1837
        %v1880 = vpack.c.b16 %v1840, %v1839
        %v1881 = vpack.c.b16 %v1842, %v1841
        %v1882 = vpack.c.b16 %v1844, %v1843
        %v1883 = vpack.c.b16 %v1846, %v1845
        %v1884 = vpack.c.b16 %v1848, %v1847
        %v1885 = vpack.c.b16 %v1850, %v1849
        %v1886 = vpack.c.b16 %v1852, %v1851
        %v1887 = vpack.c.b16 %v1854, %v1853
        %v1888 = vpack.c.b16 %v1856, %v1855
        %1921 = vmatprep.subr.bf16.mxu0 0
        %1922 = vmatpush1.bf16.msra.mxu0 %v1857
        %1923 = vmatprep.subr.bf16.mxu0 0
        %1924 = vmatpush1.bf16.msra.mxu0 %v1858
        %1925 = vmatprep.subr.bf16.mxu0 0
        %1926 = vmatpush1.bf16.msra.mxu0 %v1859
        %1927 = vmatprep.subr.bf16.mxu0 0
        %1928 = vmatpush1.bf16.msra.mxu0 %v1860
        %1929 = vmatprep.subr.bf16.mxu0 0
        %1930 = vmatpush1.bf16.msra.mxu0 %v1861
        %1931 = vmatprep.subr.bf16.mxu0 0
        %1932 = vmatpush1.bf16.msra.mxu0 %v1862
        %1933 = vmatprep.subr.bf16.mxu0 0
        %1934 = vmatpush1.bf16.msra.mxu0 %v1863
        %1935 = vmatprep.subr.bf16.mxu0 0
        %1936 = vmatpush1.bf16.msra.mxu0 %v1864
        %1937 = vmatprep.subr.bf16.mxu0 0
        %1938 = vmatpush1.bf16.msra.mxu0 %v1865
        %1939 = vmatprep.subr.bf16.mxu0 0
        %1940 = vmatpush1.bf16.msra.mxu0 %v1866
        %1941 = vmatprep.subr.bf16.mxu0 0
        %1942 = vmatpush1.bf16.msra.mxu0 %v1867
        %1943 = vmatprep.subr.bf16.mxu0 0
        %1944 = vmatpush1.bf16.msra.mxu0 %v1868
        %1945 = vmatprep.subr.bf16.mxu0 0
        %1946 = vmatpush1.bf16.msra.mxu0 %v1869
        %1947 = vmatprep.subr.bf16.mxu0 0
        %1948 = vmatpush1.bf16.msra.mxu0 %v1870
        %1949 = vmatprep.subr.bf16.mxu0 0
        %1950 = vmatpush1.bf16.msra.mxu0 %v1871
        %1951 = vmatprep.subr.bf16.mxu0 0
        %1952 = vmatpush1.bf16.msra.mxu0 %v1872
        %1953 = vmatprep.mubr.bf16.mxu0 %v1658
        %1954 = vmatmul.mubr.bf16.gmra.mrb[0].mxu0 %v1657
        %v1955 = vpop.f32.mrb[0].mxu0
        %v1956 = vadd.f32 %v1728, %v1955
        %v1957 = vpop.f32.mrb[0].mxu0
        %v1958 = vpop.f32.mrb[0].mxu0
        %v1959 = vpop.f32.mrb[0].mxu0
        %1960 = vdwg.mxu0
        %1961 = vmatprep.subr.bf16.mxu0 0
        %1962 = vmatpush1.bf16.msra.mxu0 %v1873
        %1963 = vmatprep.subr.bf16.mxu0 0
        %1964 = vmatpush1.bf16.msra.mxu0 %v1874
        %1965 = vmatprep.subr.bf16.mxu0 0
        %1966 = vmatpush1.bf16.msra.mxu0 %v1875
        %1967 = vmatprep.subr.bf16.mxu0 0
        %1968 = vmatpush1.bf16.msra.mxu0 %v1876
        %1969 = vmatprep.subr.bf16.mxu0 0
        %1970 = vmatpush1.bf16.msra.mxu0 %v1877
        %1971 = vmatprep.subr.bf16.mxu0 0
        %1972 = vmatpush1.bf16.msra.mxu0 %v1878
        %1973 = vmatprep.subr.bf16.mxu0 0
        %1974 = vmatpush1.bf16.msra.mxu0 %v1879
        %1975 = vmatprep.subr.bf16.mxu0 0
        %1976 = vmatpush1.bf16.msra.mxu0 %v1880
        %1977 = vmatprep.subr.bf16.mxu0 0
        %1978 = vmatpush1.bf16.msra.mxu0 %v1881
        %1979 = vmatprep.subr.bf16.mxu0 0
        %1980 = vmatpush1.bf16.msra.mxu0 %v1882
        %1981 = vmatprep.subr.bf16.mxu0 0
        %1982 = vmatpush1.bf16.msra.mxu0 %v1883
        %1983 = vmatprep.subr.bf16.mxu0 0
        %1984 = vmatpush1.bf16.msra.mxu0 %v1884
        %1985 = vmatprep.subr.bf16.mxu0 0
        %1986 = vmatpush1.bf16.msra.mxu0 %v1885
        %1987 = vmatprep.subr.bf16.mxu0 0
        %1988 = vmatpush1.bf16.msra.mxu0 %v1886
        %1989 = vmatprep.subr.bf16.mxu0 0
        %1990 = vmatpush1.bf16.msra.mxu0 %v1887
        %1991 = vmatprep.subr.bf16.mxu0 0
        %1992 = vmatpush1.bf16.msra.mxu0 %v1888
        %1993 = vmatprep.mubr.bf16.mxu0 %v1660
        %1994 = vmatmul.mubr.bf16.gmra.mrb[0].mxu0 %v1659
        %v1995 = vpop.f32.mrb[0].mxu0
        %v1996 = vadd.f32 %v1956, %v1995
        %v1997 = vpop.f32.mrb[0].mxu0
        %v1998 = vpop.f32.mrb[0].mxu0
        %v1999 = vpop.f32.mrb[0].mxu0
        %2000 = vdwg.mxu0
        %v2001 = vadd.f32 %v1352, %v1996
        %v2002 = vsel %vm534, %v2001, 0.0
        %2003 = vadd.xlane.f32.xlu0 %v2002
        %v2004 = vpop.xlane.xlu0 %2003
        %v2005 = vmul.f32 %v2004, %v1332
        %v2006 = vsub.f32 %v2001, %v2005
        %v2007 = vmul.f32 %v2006, %v2006
        %v2008 = vsel %vm534, %v2007, 0.0
        %2009 = vadd.xlane.f32.xlu0 %v2008
        %v2010 = vpop.xlane.xlu0 %2009
        %v2011 = vmul.f32 %v2010, %v1332
        %v2012 = vadd.f32 %v2011, 1e-05
        %v2013 = vrsqrt.pop %v2012
        %v2014 = vmul.f32 %v2006, %v2013
        %v2015 = vlaneseq
        %v2016 = vshrl.u32 %v2015, 7
        %v2017 = vsub.s32 0, %v2016
        %v2018 = vrot.slane %v364, %v2017
        %v2019 = vmul.f32 %v2014, %v2018
        %v2020 = vlaneseq
        %v2021 = vshrl.u32 %v2020, 7
        %v2022 = vsub.s32 0, %v2021
        %v2023 = vrot.slane %v365, %v2022
        %v2024 = vadd.f32 %v2019, %v2023
        %2025 = vst.msk [vmem:[%s351] sm:$0xff] %vm534, %v2024
        %s2026 = sand.u32 %s211, 1
        %s2027 = scalar_lea.sflag [#allocation4], %s2026
        %s2028 = sand.u32 %s211, 1
        %s2029 = smul.addr %s2028, 8
        %s2030 = scalar_lea.vmem [#allocation5], %s2029
        %s2031 = sand.u32 %s237, 1
        %s2032 = scalar_lea.sflag [#allocation7], %s2031
        %s2033 = sand.u32 %s237, 1
        %s2034 = scalar_lea.vmem [#allocation6], %s2033
        // Predicated region
        $region57: #{tpu_custom_call.1} parent=51 // pred_check
          %p2035 = pneg %p221
        $region58: #{tpu_custom_call.1} parent=51 // pred_check_branch
          %2037 = sbr.rel (%p2035) target = $region60
        $region59: #{tpu_custom_call.1} parent=51 // pred_region
          %s2039 = ssub.s32 128, 128
          %2040 = vsyncadd %s2027, %s2039
          %s2041 = smul.addr %s30, 128
          %s2042 = scalar_lea.hbm %s8, %s2041
          %s2044 = sshll.u32 %s2030, 4
          %s2045 = int_to_ptr.vmem [resolvable:$true] %s2044
          %2047 = dma.vmem_to_hbm [thread:$0]  %s2045, 128, %s2042, %s2027
        $region60: #{tpu_custom_call.1} parent=51 // pred_fallthru
          _
        // Predicated region
        $region61: #{tpu_custom_call.1} parent=51 // pred_check
          %p2048 = pneg %p247
        $region62: #{tpu_custom_call.1} parent=51 // pred_check_branch
          %2050 = sbr.rel (%p2048) target = $region64
        $region63: #{tpu_custom_call.1} parent=51 // pred_region
          %s2052 = ssub.s32 16, 16
          %2053 = vsyncadd %s2032, %s2052
          %s2054 = smul.addr %s30, 16
          %s2055 = scalar_lea.hbm %s9, %s2054
          %s2057 = sshll.u32 %s2034, 4
          %s2058 = int_to_ptr.vmem [resolvable:$true] %s2057
          %2060 = dma.vmem_to_hbm [thread:$0]  %s2058, 16, %s2055, %s2032
        $region64: #{tpu_custom_call.1} parent=51 // pred_fallthru
          _
      $region52: #{tpu_custom_call.1} parent=5 // pred_fallthru
        _
      %p2061 = scmp.le.s32.totalorder 2, %s25
      // Predicated region
      $region65: #{tpu_custom_call.1} parent=5 // pred_check
        %p2062 = pneg %p2061
      $region66: #{tpu_custom_call.1} parent=5 // pred_check_branch
        %2064 = sbr.rel (%p2062) target = $region68
      $region67: #{tpu_custom_call.1} parent=5 // pred_region
        %s2065 = ssub.s32 %s25, 2
        // Predicated region
        $region69: #{tpu_custom_call.1} parent=67 // pred_check
          %p2066 = pneg %p227
        $region70: #{tpu_custom_call.1} parent=67 // pred_check_branch
          %2068 = sbr.rel (%p2066) target = $region72
        $region71: #{tpu_custom_call.1} parent=67 // pred_region
          %s2069 = sand.u32 %s212, 1
          %s2070 = scalar_lea.sflag [#allocation4], %s2069
          %s2071 = sand.u32 %s212, 1
          %s2072 = smul.addr %s2071, 8
          %s2073 = scalar_lea.vmem [#allocation5], %s2072
          %2074 = dma.done %s2070, 128
        $region72: #{tpu_custom_call.1} parent=67 // pred_fallthru
          _
        // Predicated region
        $region73: #{tpu_custom_call.1} parent=67 // pred_check
          %p2075 = pneg %p253
        $region74: #{tpu_custom_call.1} parent=67 // pred_check_branch
          %2077 = sbr.rel (%p2075) target = $region76
        $region75: #{tpu_custom_call.1} parent=67 // pred_region
          %s2078 = sand.u32 %s238, 1
          %s2079 = scalar_lea.sflag [#allocation7], %s2078
          %s2080 = sand.u32 %s238, 1
          %s2081 = scalar_lea.vmem [#allocation6], %s2080
          %2082 = dma.done %s2079, 16
        $region76: #{tpu_custom_call.1} parent=67 // pred_fallthru
          _
      $region68: #{tpu_custom_call.1} parent=5 // pred_fallthru
        _
    $region6: #{tpu_custom_call.1} parent=1 // loop_footer
      %s29 = sadd.s32 1, %s25
    $region7: #{tpu_custom_call.1} parent=1 // loop_footer_branch
      %24 = sbr.rel target = $region3
    $region8: #{tpu_custom_call.1} parent=1 // loop_exit
      _
    %2083 = vsyncpa [#allocation3], 1
    %s2084 = scalar_lea.sflag [#allocation3], 1
    %2085 = vsyncpa %s2084, 1
    %2086 = vsyncpa [#allocation4], 1
    %s2087 = scalar_lea.sflag [#allocation4], 1
    %2088 = vsyncpa %s2087, 1
    %2089 = vsyncpa [#allocation7], 1
    %s2090 = scalar_lea.sflag [#allocation7], 1
    %2091 = vsyncpa %s2090, 1

</llo_original>
